<compile_context>
chip_gen: v6e
topology: v6e:2x2x1
jax: 0.10.0
libtpu: 0.0.40
codegen_flags: <defaults>
</compile_context>

<pallas_src>
import functools

import jax
import jax.numpy as jnp
from jax import lax
from jax.experimental import pallas as pl
from jax.experimental.pallas import tpu as pltpu

NUM_SAMPLES = 50          # reparameterize(mean, std, 50)
SAMPLE_CHUNK = 8          # sublane-aligned streaming chunk


def _round_up(x, m):
    return (x + m - 1) // m * m


def _uncertainty_pass1_kernel(
    x_ref,          # (C, T)   bf16   input pixels (channels x pixel tile)
    eps_s_ref,      # (S, T)   bf16   N(0,1) noise for the 50 MC samples
    eps1_ref,       # (1, T)   f32    N(0,1) noise for prob_x
    w_in_ref,       # (Hd, C)  bf16   input_proj conv weight
    bn_scale_ref,   # (Hd, 1)  f32    folded eval-BN scale
    bn_bias_ref,    # (Hd, 1)  f32    folded eval-BN bias
    w_heads_ref,    # (HP, Hd) bf16   packed [conv | mean | std] weights
    b_heads_ref,    # (HP, 1)  f32    packed bias (conv bias, zeros elsewhere)
    resid_ref,      # out (Hd, T) bf16  un-scaled residual
    prob_x_ref,     # out (1, T)  f32
    var_ref,        # out (1, T)  f32   per-pixel variance of sigmoid samples
):
    hd = resid_ref.shape[0]
    tile = x_ref.shape[1]
    mean_row = _round_up(hd, 8)          # 8-aligned sublane offsets -> cheap slices
    std_row = mean_row + 8

    # ---- input_proj: 1x1 conv + folded eval-BN + ReLU (Dropout2d = id) ------
    h = jnp.dot(w_in_ref[...], x_ref[...], preferred_element_type=jnp.float32)
    h = h * bn_scale_ref[...] + bn_bias_ref[...]
    h = jnp.maximum(h, 0.0)                                    # (Hd, T) f32

    # ---- fused heads: one MXU push for conv / mean_conv / std_conv ----------
    heads = jnp.dot(w_heads_ref[...], h.astype(w_heads_ref.dtype),
                    preferred_element_type=jnp.float32)        # (HP, T)
    heads = heads + b_heads_ref[...]
    mean = heads[mean_row:mean_row + 1, :]                     # (1, T)
    logv = heads[std_row:std_row + 1, :]                       # (1, T)
    resid_ref[...] = heads[:hd, :].astype(resid_ref.dtype)     # write early

    stdv = jnp.exp(0.5 * logv)                                 # (1, T)

    # ---- reparameterize(mean, std, 1) ---------------------------------------
    prob_x_ref[...] = eps1_ref[...] * stdv + mean

    # ---- reparameterize(mean, std, 50) -> sigmoid -> unbiased variance ------
    # sigmoid(z) = 0.5*(tanh(z/2)+1)  =>  var(sigmoid) = 0.25 * var(tanh(z/2)).
    # Streaming sum / sum-of-squares over 8-sublane chunks: per-sample work is
    # one FMA + one tanh; nothing of shape (S, T) is ever materialized.
    half_std = 0.5 * stdv                                      # hoisted per tile
    half_mean = 0.5 * mean
    n_full = NUM_SAMPLES // SAMPLE_CHUNK
    rem = NUM_SAMPLES - n_full * SAMPLE_CHUNK

    def chunk_stats(e_chunk):
        t = jnp.tanh(e_chunk.astype(jnp.float32) * half_std + half_mean)
        return (jnp.sum(t, axis=0, keepdims=True),
                jnp.sum(t * t, axis=0, keepdims=True))

    def body(i, carry):
        s1, s2 = carry
        off = pl.multiple_of(i * SAMPLE_CHUNK, SAMPLE_CHUNK)
        a, b = chunk_stats(eps_s_ref[pl.ds(off, SAMPLE_CHUNK), :])
        return (s1 + a, s2 + b)

    zero = jnp.zeros((1, tile), jnp.float32)
    s1, s2 = lax.fori_loop(0, n_full, body, (zero, zero), unroll=True)
    if rem:                                                    # static tail (2 rows)
        a, b = chunk_stats(eps_s_ref[n_full * SAMPLE_CHUNK:NUM_SAMPLES, :])
        s1, s2 = s1 + a, s2 + b

    # torch.var (unbiased) of sigmoid samples, via 0.25 * var(tanh).
    var_t = (s2 - s1 * s1 * (1.0 / NUM_SAMPLES)) * (1.0 / (NUM_SAMPLES - 1))
    var_ref[...] = jnp.maximum(0.25 * var_t, 0.0)


def _uncertainty_pass2_kernel(stats_ref, resid_ref, var_ref, out_ref):
    # stats (SMEM): [umin, 1/(umax - umin)]; matches PyTorch min/max normalize.
    umin = stats_ref[0]
    inv_range = stats_ref[1]
    u = (var_ref[...] - umin) * inv_range                      # (1, T)
    out_ref[...] = resid_ref[...].astype(jnp.float32) * (1.0 - u)


def _pick_tile(hw, cap=4096):
    """Largest power-of-two multiple of 128 dividing hw (capped for VMEM)."""
    tile = 128
    while tile * 2 <= min(hw, cap) and hw % (tile * 2) == 0:
        tile *= 2
    return tile


@functools.partial(jax.jit, static_argnames=("tile_hw",))
def get_uncertainty_forward(x_nchw, params, key, tile_hw=None):
    """Eval-mode forward.  x_nchw: [B, C, H, W] (C == hidden_dim required).

    Returns (residual [B, Hd, H, W], prob_x [B, 1, H, W]).
    """
    B, C, H, W = x_nchw.shape
    Hd = params["w_conv"].shape[0]
    HW = H * W
    if HW % 128 != 0:
        raise ValueError("H*W must be a multiple of 128")
    if C != params["w_mean"].shape[1] or C != Hd:
        raise ValueError("input_dim must equal hidden_dim (module constraint)")
    tile = tile_hw if tile_hw is not None else _pick_tile(HW)
    n_tiles = HW // tile

    # ---- host-side Gaussian noise (bf16 sample stream, f32 prob_x draw) -----
    k_s, k_1 = jax.random.split(key)
    eps_s = jax.random.normal(k_s, (B, NUM_SAMPLES, HW), dtype=jnp.bfloat16)
    eps1 = jax.random.normal(k_1, (B, 1, HW), dtype=jnp.float32)

    # ---- parameter prep: folded BN, packed heads, bf16 matmul operands ------
    inv_std = params["bn_gamma"] / jnp.sqrt(params["bn_var"] + 1e-5)
    bn_scale = inv_std.reshape(Hd, 1).astype(jnp.float32)
    bn_bias = ((params["bn_beta"] - params["bn_mean"] * inv_std)
               .reshape(Hd, 1).astype(jnp.float32))

    hd_pad = _round_up(Hd, 8)
    HP = hd_pad + 16
    w_heads = jnp.zeros((HP, Hd), jnp.float32)
    w_heads = w_heads.at[:Hd].set(params["w_conv"])
    w_heads = w_heads.at[hd_pad].set(params["w_mean"][0])
    w_heads = w_heads.at[hd_pad + 8].set(params["w_std"][0])
    b_heads = jnp.zeros((HP, 1), jnp.float32).at[:Hd, 0].set(params["b_conv"])

    x_cw = x_nchw.reshape(B, C, HW).astype(jnp.bfloat16)   # free reshape, no transpose
    w_in = params["w_in"].astype(jnp.bfloat16)
    w_heads = w_heads.astype(jnp.bfloat16)

    n_pix = B * HW
    cost = pl.CostEstimate(
        flops=n_pix * (2 * C * Hd + 2 * Hd * HP + 4 * NUM_SAMPLES + 32),
        transcendentals=n_pix * (NUM_SAMPLES + 1),
        bytes_accessed=(n_pix * (2 * C + 2 * NUM_SAMPLES + 4 + 2 * Hd + 8)
                        + (Hd * C + HP * Hd) * 2 + (2 * Hd + HP) * 4),
    )

    grid = (B, n_tiles)
    row_c = lambda b, i: (b, 0, i)
    const = lambda b, i: (0, 0)                 # weights stay VMEM-resident

    resid_u, prob_x, var = pl.pallas_call(
        _uncertainty_pass1_kernel,
        grid=grid,
        in_specs=[
            pl.BlockSpec((None, C, tile), row_c),
            pl.BlockSpec((None, NUM_SAMPLES, tile), row_c),
            pl.BlockSpec((None, 1, tile), row_c),
            pl.BlockSpec((Hd, C), const),
            pl.BlockSpec((Hd, 1), const),
            pl.BlockSpec((Hd, 1), const),
            pl.BlockSpec((HP, Hd), const),
            pl.BlockSpec((HP, 1), const),
        ],
        out_specs=[
            pl.BlockSpec((None, Hd, tile), row_c),
            pl.BlockSpec((None, 1, tile), row_c),
            pl.BlockSpec((None, 1, tile), row_c),
        ],
        out_shape=(
            jax.ShapeDtypeStruct((B, Hd, HW), jnp.bfloat16),   # bf16 round-trip
            jax.ShapeDtypeStruct((B, 1, HW), jnp.float32),
            jax.ShapeDtypeStruct((B, 1, HW), jnp.float32),
        ),
        compiler_params=pltpu.CompilerParams(
            dimension_semantics=("parallel", "parallel"),
            vmem_limit_bytes=32 * 1024 * 1024,
        ),
        cost_estimate=cost,
    )(x_cw, eps_s, eps1, w_in, bn_scale, bn_bias, w_heads, b_heads)

    # ---- global min/max over the whole uncertainty map (trivial XLA reduce) -
    umin = jnp.min(var)
    umax = jnp.max(var)
    # NOTE: umax == umin yields inf/NaN, matching the PyTorch reference.
    stats = jnp.stack([umin, 1.0 / (umax - umin)]).astype(jnp.float32)   # (2,)

    # ---- pass 2: normalize uncertainty + scale residual ---------------------
    residual = pl.pallas_call(
        _uncertainty_pass2_kernel,
        grid=grid,
        in_specs=[
            pl.BlockSpec(memory_space=pltpu.MemorySpace.SMEM),   # stats as scalars
            pl.BlockSpec((None, Hd, tile), row_c),
            pl.BlockSpec((None, 1, tile), row_c),
        ],
        out_specs=pl.BlockSpec((None, Hd, tile), row_c),
        out_shape=jax.ShapeDtypeStruct((B, Hd, HW), jnp.float32),
        compiler_params=pltpu.CompilerParams(
            dimension_semantics=("parallel", "parallel"),
        ),
    )(stats, resid_u, var)

    return residual.reshape(B, Hd, H, W), prob_x.reshape(B, 1, H, W)


if __name__ == "__main__":
    key = jax.random.PRNGKey(0)
    ks = jax.random.split(key, 7)

    # Small demo shapes; the module requires input_dim == hidden_dim (its
    # mean/std convs take input_dim channels but are applied to the hidden
    # projection), so C == hidden.
    B, C, H, W = 2, 32, 16, 16
    hidden = 32

    x = jax.random.normal(ks[0], (B, C, H, W), dtype=jnp.float32)

    params = {
        # Conv2d(C, hidden, 1, bias=False)
        "w_in": 0.1 * jax.random.normal(ks[1], (hidden, C), dtype=jnp.float32),
        # BatchNorm2d(hidden), eval mode, fresh running stats
        "bn_gamma": jnp.ones((hidden,), jnp.float32),
        "bn_beta": jnp.zeros((hidden,), jnp.float32),
        "bn_mean": jnp.zeros((hidden,), jnp.float32),
        "bn_var": jnp.ones((hidden,), jnp.float32),
        # Conv2d(hidden, hidden, 1)
        "w_conv": 0.1 * jax.random.normal(ks[2], (hidden, hidden), dtype=jnp.float32),
        "b_conv": 0.1 * jax.random.normal(ks[3], (hidden,), dtype=jnp.float32),
        # Conv2d(input_dim, 1, 1, bias=False) x2  (mean_conv / std_conv)
        "w_mean": 0.1 * jax.random.normal(ks[4], (1, hidden), dtype=jnp.float32),
        "w_std": 0.1 * jax.random.normal(ks[5], (1, hidden), dtype=jnp.float32),
    }

    # tile_hw=128 so even this small demo exercises a multi-tile grid;
    # real-sized inputs auto-pick tiles up to 4096 pixels per step.
    residual, prob_x = get_uncertainty_forward(x, params, ks[6], tile_hw=128)
    jax.block_until_ready((residual, prob_x))

    assert residual.shape == (B, hidden, H, W)
    assert prob_x.shape == (B, 1, H, W)
    assert bool(jnp.all(jnp.isfinite(residual)))
    assert bool(jnp.all(jnp.isfinite(prob_x)))
    print("KERNEL_OK")
</pallas_src>

<mosaic_0001>
module attributes {stable_mosaic.version = 11 : i64} {
  func.func @_uncertainty_pass2_kernel(%arg0: i32, %arg1: i32, %arg2: memref<2xf32, #tpu.memory_space<smem>>, %arg3: memref<1x32x128xbf16, #tpu.memory_space<vmem>>, %arg4: memref<1x1x128xf32, #tpu.memory_space<vmem>>, %arg5: memref<1x32x128xf32, #tpu.memory_space<vmem>>) attributes {dimension_semantics = [#tpu.dimension_semantics<parallel>, #tpu.dimension_semantics<parallel>], iteration_bounds = array<i64: 2, 2>, scalar_prefetch = 0 : i64, scratch_operands = 0 : i64, tpu.core_type = #tpu.core_type<tc>, window_params = [{transform_indices = @transform_0, window_bounds = array<i64: 2>}, {transform_indices = @transform_1, window_bounds = array<i64: 1, 32, 128>}, {transform_indices = @transform_2, window_bounds = array<i64: 1, 1, 128>}, {transform_indices = @transform_3, window_bounds = array<i64: 1, 32, 128>}]} {
    %c0 = arith.constant 0 : index
    %0 = memref.load %arg2[%c0] : memref<2xf32, #tpu.memory_space<smem>>
    %c1 = arith.constant 1 : index
    %1 = memref.load %arg2[%c1] : memref<2xf32, #tpu.memory_space<smem>>
    %c0_0 = arith.constant 0 : index
    %c0_1 = arith.constant 0 : index
    %c0_2 = arith.constant 0 : index
    %2 = vector.load %arg4[%c0_0, %c0_1, %c0_2] : memref<1x1x128xf32, #tpu.memory_space<vmem>>, vector<1x1x128xf32>
    %3 = vector.shape_cast %2 : vector<1x1x128xf32> to vector<1x128xf32>
    %4 = vector.broadcast %0 : f32 to vector<1x128xf32>
    %5 = arith.subf %3, %4 : vector<1x128xf32>
    %6 = vector.broadcast %1 : f32 to vector<1x128xf32>
    %7 = arith.mulf %5, %6 : vector<1x128xf32>
    %c0_3 = arith.constant 0 : index
    %c0_4 = arith.constant 0 : index
    %c0_5 = arith.constant 0 : index
    %8 = vector.load %arg3[%c0_3, %c0_4, %c0_5] : memref<1x32x128xbf16, #tpu.memory_space<vmem>>, vector<1x32x128xbf16>
    %9 = vector.shape_cast %8 : vector<1x32x128xbf16> to vector<32x128xbf16>
    %10 = arith.extf %9 : vector<32x128xbf16> to vector<32x128xf32>
    %cst = arith.constant 1.000000e+00 : f32
    %11 = vector.broadcast %cst : f32 to vector<1x128xf32>
    %12 = arith.subf %11, %7 : vector<1x128xf32>
    %13 = vector.broadcast %12 : vector<1x128xf32> to vector<32x128xf32>
    %14 = arith.mulf %10, %13 : vector<32x128xf32>
    %c0_6 = arith.constant 0 : index
    %c0_7 = arith.constant 0 : index
    %c0_8 = arith.constant 0 : index
    %15 = vector.load %arg5[%c0_6, %c0_7, %c0_8] : memref<1x32x128xf32, #tpu.memory_space<vmem>>, vector<1x32x128xf32>
    %16 = vector.shape_cast %15 : vector<1x32x128xf32> to vector<32x128xf32>
    %17 = vector.shape_cast %14 : vector<32x128xf32> to vector<1x32x128xf32>
    tpu.vector_store %arg5[%c0_6, %c0_7, %c0_8], %17 {strides = array<i32>} : memref<1x32x128xf32, #tpu.memory_space<vmem>>, vector<1x32x128xf32>,
    return
  }
  func.func @transform_0(%arg0: i32, %arg1: i32) -> i32 {
    %c0_i32 = arith.constant 0 : i32
    %c0_i32_0 = arith.constant 0 : i32
    return %c0_i32 : i32
  }
  func.func @transform_1(%arg0: i32, %arg1: i32) -> (i32, i32, i32) {
    %c0_i32 = arith.constant 0 : i32
    %c0_i32_0 = arith.constant 0 : i32
    return %arg0, %c0_i32, %arg1 : i32, i32, i32
  }
  func.func @transform_2(%arg0: i32, %arg1: i32) -> (i32, i32, i32) {
    %c0_i32 = arith.constant 0 : i32
    %c0_i32_0 = arith.constant 0 : i32
    return %arg0, %c0_i32, %arg1 : i32, i32, i32
  }
  func.func @transform_3(%arg0: i32, %arg1: i32) -> (i32, i32, i32) {
    %c0_i32 = arith.constant 0 : i32
    %c0_i32_0 = arith.constant 0 : i32
    return %arg0, %c0_i32, %arg1 : i32, i32, i32
  }
}

module attributes {stable_mosaic.version = 11 : i64} {
  func.func @_uncertainty_pass1_kernel(%arg0: i32, %arg1: i32, %arg2: memref<1x32x128xbf16, #tpu.memory_space<vmem>>, %arg3: memref<1x50x128xbf16, #tpu.memory_space<vmem>>, %arg4: memref<1x1x128xf32, #tpu.memory_space<vmem>>, %arg5: memref<32x32xbf16, #tpu.memory_space<vmem>>, %arg6: memref<32x1xf32, #tpu.memory_space<vmem>>, %arg7: memref<32x1xf32, #tpu.memory_space<vmem>>, %arg8: memref<48x32xbf16, #tpu.memory_space<vmem>>, %arg9: memref<48x1xf32, #tpu.memory_space<vmem>>, %arg10: memref<1x32x128xbf16, #tpu.memory_space<vmem>>, %arg11: memref<1x1x128xf32, #tpu.memory_space<vmem>>, %arg12: memref<1x1x128xf32, #tpu.memory_space<vmem>>) attributes {dimension_semantics = [#tpu.dimension_semantics<parallel>, #tpu.dimension_semantics<parallel>], iteration_bounds = array<i64: 2, 2>, scalar_prefetch = 0 : i64, scratch_operands = 0 : i64, tpu.core_type = #tpu.core_type<tc>, window_params = [{transform_indices = @transform_0, window_bounds = array<i64: 1, 32, 128>}, {transform_indices = @transform_1, window_bounds = array<i64: 1, 50, 128>}, {transform_indices = @transform_2, window_bounds = array<i64: 1, 1, 128>}, {pipeline_mode = #tpu.pipeline_mode<synchronous>, transform_indices = @transform_3, window_bounds = array<i64: 32, 32>}, {pipeline_mode = #tpu.pipeline_mode<synchronous>, transform_indices = @transform_4, window_bounds = array<i64: 32, 1>}, {pipeline_mode = #tpu.pipeline_mode<synchronous>, transform_indices = @transform_5, window_bounds = array<i64: 32, 1>}, {pipeline_mode = #tpu.pipeline_mode<synchronous>, transform_indices = @transform_6, window_bounds = array<i64: 48, 32>}, {pipeline_mode = #tpu.pipeline_mode<synchronous>, transform_indices = @transform_7, window_bounds = array<i64: 48, 1>}, {transform_indices = @transform_8, window_bounds = array<i64: 1, 32, 128>}, {transform_indices = @transform_9, window_bounds = array<i64: 1, 1, 128>}, {transform_indices = @transform_10, window_bounds = array<i64: 1, 1, 128>}]} {
    %c0 = arith.constant 0 : index
    %c0_0 = arith.constant 0 : index
    %0 = vector.load %arg5[%c0, %c0_0] : memref<32x32xbf16, #tpu.memory_space<vmem>>, vector<32x32xbf16>
    %c0_1 = arith.constant 0 : index
    %c0_2 = arith.constant 0 : index
    %c0_3 = arith.constant 0 : index
    %1 = vector.load %arg2[%c0_1, %c0_2, %c0_3] : memref<1x32x128xbf16, #tpu.memory_space<vmem>>, vector<1x32x128xbf16>
    %2 = vector.shape_cast %1 : vector<1x32x128xbf16> to vector<32x128xbf16>
    %cst = arith.constant dense<0.000000e+00> : vector<32x128xf32>
    %3 = tpu.matmul %0, %2, %cst {dimension_numbers = #tpu.dot_dimension_numbers<[1], [0], [0], [1], [0, 0, 1, 1], [], []>} : vector<32x32xbf16>, vector<32x128xbf16>, vector<32x128xf32> -> vector<32x128xf32>
    %c0_4 = arith.constant 0 : index
    %c0_5 = arith.constant 0 : index
    %4 = vector.load %arg6[%c0_4, %c0_5] : memref<32x1xf32, #tpu.memory_space<vmem>>, vector<32x1xf32>
    %5 = vector.broadcast %4 : vector<32x1xf32> to vector<32x128xf32>
    %6 = arith.mulf %3, %5 : vector<32x128xf32>
    %c0_6 = arith.constant 0 : index
    %c0_7 = arith.constant 0 : index
    %7 = vector.load %arg7[%c0_6, %c0_7] : memref<32x1xf32, #tpu.memory_space<vmem>>, vector<32x1xf32>
    %8 = vector.broadcast %7 : vector<32x1xf32> to vector<32x128xf32>
    %9 = arith.addf %6, %8 : vector<32x128xf32>
    %cst_8 = arith.constant 0.000000e+00 : f32
    %10 = vector.broadcast %cst_8 : f32 to vector<32x128xf32>
    %11 = arith.maximumf %9, %10 : vector<32x128xf32>
    %c0_9 = arith.constant 0 : index
    %c0_10 = arith.constant 0 : index
    %12 = vector.load %arg8[%c0_9, %c0_10] : memref<48x32xbf16, #tpu.memory_space<vmem>>, vector<48x32xbf16>
    %13 = arith.truncf %11 : vector<32x128xf32> to vector<32x128xbf16>
    %cst_11 = arith.constant dense<0.000000e+00> : vector<48x128xf32>
    %14 = tpu.matmul %12, %13, %cst_11 {dimension_numbers = #tpu.dot_dimension_numbers<[1], [0], [0], [1], [0, 0, 1, 1], [], []>} : vector<48x32xbf16>, vector<32x128xbf16>, vector<48x128xf32> -> vector<48x128xf32>
    %c0_12 = arith.constant 0 : index
    %c0_13 = arith.constant 0 : index
    %15 = vector.load %arg9[%c0_12, %c0_13] : memref<48x1xf32, #tpu.memory_space<vmem>>, vector<48x1xf32>
    %16 = vector.broadcast %15 : vector<48x1xf32> to vector<48x128xf32>
    %17 = arith.addf %14, %16 : vector<48x128xf32>
    %18 = vector.extract_strided_slice %17 {offsets = [32, 0], sizes = [1, 128], strides = [1, 1]} : vector<48x128xf32> to vector<1x128xf32>
    %19 = vector.extract_strided_slice %17 {offsets = [40, 0], sizes = [1, 128], strides = [1, 1]} : vector<48x128xf32> to vector<1x128xf32>
    %20 = vector.extract_strided_slice %17 {offsets = [0, 0], sizes = [32, 128], strides = [1, 1]} : vector<48x128xf32> to vector<32x128xf32>
    %21 = arith.truncf %20 : vector<32x128xf32> to vector<32x128xbf16>
    %c0_14 = arith.constant 0 : index
    %c0_15 = arith.constant 0 : index
    %c0_16 = arith.constant 0 : index
    %22 = vector.load %arg10[%c0_14, %c0_15, %c0_16] : memref<1x32x128xbf16, #tpu.memory_space<vmem>>, vector<1x32x128xbf16>
    %23 = vector.shape_cast %22 : vector<1x32x128xbf16> to vector<32x128xbf16>
    %24 = vector.shape_cast %21 : vector<32x128xbf16> to vector<1x32x128xbf16>
    tpu.vector_store %arg10[%c0_14, %c0_15, %c0_16], %24 {strides = array<i32>} : memref<1x32x128xbf16, #tpu.memory_space<vmem>>, vector<1x32x128xbf16>,
    %cst_17 = arith.constant 5.000000e-01 : f32
    %25 = vector.broadcast %cst_17 : f32 to vector<1x128xf32>
    %26 = arith.mulf %25, %19 : vector<1x128xf32>
    %27 = math.exp %26 : vector<1x128xf32>
    %c0_18 = arith.constant 0 : index
    %c0_19 = arith.constant 0 : index
    %c0_20 = arith.constant 0 : index
    %28 = vector.load %arg4[%c0_18, %c0_19, %c0_20] : memref<1x1x128xf32, #tpu.memory_space<vmem>>, vector<1x1x128xf32>
    %29 = vector.shape_cast %28 : vector<1x1x128xf32> to vector<1x128xf32>
    %30 = arith.mulf %29, %27 : vector<1x128xf32>
    %31 = arith.addf %30, %18 : vector<1x128xf32>
    %c0_21 = arith.constant 0 : index
    %c0_22 = arith.constant 0 : index
    %c0_23 = arith.constant 0 : index
    %32 = vector.load %arg11[%c0_21, %c0_22, %c0_23] : memref<1x1x128xf32, #tpu.memory_space<vmem>>, vector<1x1x128xf32>
    %33 = vector.shape_cast %32 : vector<1x1x128xf32> to vector<1x128xf32>
    %34 = vector.shape_cast %31 : vector<1x128xf32> to vector<1x1x128xf32>
    tpu.vector_store %arg11[%c0_21, %c0_22, %c0_23], %34 {strides = array<i32>} : memref<1x1x128xf32, #tpu.memory_space<vmem>>, vector<1x1x128xf32>,
    %cst_24 = arith.constant 5.000000e-01 : f32
    %35 = vector.broadcast %cst_24 : f32 to vector<1x128xf32>
    %36 = arith.mulf %35, %27 : vector<1x128xf32>
    %cst_25 = arith.constant 5.000000e-01 : f32
    %37 = vector.broadcast %cst_25 : f32 to vector<1x128xf32>
    %38 = arith.mulf %37, %18 : vector<1x128xf32>
    %cst_26 = arith.constant 0.000000e+00 : f32
    %39 = vector.broadcast %cst_26 : f32 to vector<1x128xf32>
    %c0_i32 = arith.constant 0 : i32
    %c8_i32 = arith.constant 8 : i32
    %40 = arith.muli %c0_i32, %c8_i32 : i32
    %41 = tpu.assume_multiple %40, 8 : i32
    %c0_27 = arith.constant 0 : index
    %42 = arith.index_cast %41 : i32 to index
    %c0_28 = arith.constant 0 : index
    %43 = vector.load %arg3[%c0_27, %42, %c0_28] : memref<1x50x128xbf16, #tpu.memory_space<vmem>>, vector<1x8x128xbf16>
    %44 = vector.shape_cast %43 : vector<1x8x128xbf16> to vector<8x128xbf16>
    %45 = arith.extf %44 : vector<8x128xbf16> to vector<8x128xf32>
    %46 = vector.broadcast %36 : vector<1x128xf32> to vector<8x128xf32>
    %47 = arith.mulf %45, %46 : vector<8x128xf32>
    %48 = vector.broadcast %38 : vector<1x128xf32> to vector<8x128xf32>
    %49 = arith.addf %47, %48 : vector<8x128xf32>
    %50 = math.tanh %49 : vector<8x128xf32>
    %cst_29 = arith.constant dense<0.000000e+00> : vector<128xf32>
    %51 = vector.multi_reduction <add>, %50, %cst_29 [0] : vector<8x128xf32> to vector<128xf32>
    %52 = vector.shape_cast %51 : vector<128xf32> to vector<1x128xf32>
    %53 = arith.mulf %50, %50 : vector<8x128xf32>
    %cst_30 = arith.constant dense<0.000000e+00> : vector<128xf32>
    %54 = vector.multi_reduction <add>, %53, %cst_30 [0] : vector<8x128xf32> to vector<128xf32>
    %55 = vector.shape_cast %54 : vector<128xf32> to vector<1x128xf32>
    %56 = arith.addf %39, %52 : vector<1x128xf32>
    %57 = arith.addf %39, %55 : vector<1x128xf32>
    %c1_i32 = arith.constant 1 : i32
    %c8_i32_31 = arith.constant 8 : i32
    %58 = arith.muli %c1_i32, %c8_i32_31 : i32
    %59 = tpu.assume_multiple %58, 8 : i32
    %c0_32 = arith.constant 0 : index
    %60 = arith.index_cast %59 : i32 to index
    %c0_33 = arith.constant 0 : index
    %61 = vector.load %arg3[%c0_32, %60, %c0_33] : memref<1x50x128xbf16, #tpu.memory_space<vmem>>, vector<1x8x128xbf16>
    %62 = vector.shape_cast %61 : vector<1x8x128xbf16> to vector<8x128xbf16>
    %63 = arith.extf %62 : vector<8x128xbf16> to vector<8x128xf32>
    %64 = vector.broadcast %36 : vector<1x128xf32> to vector<8x128xf32>
    %65 = arith.mulf %63, %64 : vector<8x128xf32>
    %66 = vector.broadcast %38 : vector<1x128xf32> to vector<8x128xf32>
    %67 = arith.addf %65, %66 : vector<8x128xf32>
    %68 = math.tanh %67 : vector<8x128xf32>
    %cst_34 = arith.constant dense<0.000000e+00> : vector<128xf32>
    %69 = vector.multi_reduction <add>, %68, %cst_34 [0] : vector<8x128xf32> to vector<128xf32>
    %70 = vector.shape_cast %69 : vector<128xf32> to vector<1x128xf32>
    %71 = arith.mulf %68, %68 : vector<8x128xf32>
    %cst_35 = arith.constant dense<0.000000e+00> : vector<128xf32>
    %72 = vector.multi_reduction <add>, %71, %cst_35 [0] : vector<8x128xf32> to vector<128xf32>
    %73 = vector.shape_cast %72 : vector<128xf32> to vector<1x128xf32>
    %74 = arith.addf %56, %70 : vector<1x128xf32>
    %75 = arith.addf %57, %73 : vector<1x128xf32>
    %c2_i32 = arith.constant 2 : i32
    %c8_i32_36 = arith.constant 8 : i32
    %76 = arith.muli %c2_i32, %c8_i32_36 : i32
    %77 = tpu.assume_multiple %76, 8 : i32
    %c0_37 = arith.constant 0 : index
    %78 = arith.index_cast %77 : i32 to index
    %c0_38 = arith.constant 0 : index
    %79 = vector.load %arg3[%c0_37, %78, %c0_38] : memref<1x50x128xbf16, #tpu.memory_space<vmem>>, vector<1x8x128xbf16>
    %80 = vector.shape_cast %79 : vector<1x8x128xbf16> to vector<8x128xbf16>
    %81 = arith.extf %80 : vector<8x128xbf16> to vector<8x128xf32>
    %82 = vector.broadcast %36 : vector<1x128xf32> to vector<8x128xf32>
    %83 = arith.mulf %81, %82 : vector<8x128xf32>
    %84 = vector.broadcast %38 : vector<1x128xf32> to vector<8x128xf32>
    %85 = arith.addf %83, %84 : vector<8x128xf32>
    %86 = math.tanh %85 : vector<8x128xf32>
    %cst_39 = arith.constant dense<0.000000e+00> : vector<128xf32>
    %87 = vector.multi_reduction <add>, %86, %cst_39 [0] : vector<8x128xf32> to vector<128xf32>
    %88 = vector.shape_cast %87 : vector<128xf32> to vector<1x128xf32>
    %89 = arith.mulf %86, %86 : vector<8x128xf32>
    %cst_40 = arith.constant dense<0.000000e+00> : vector<128xf32>
    %90 = vector.multi_reduction <add>, %89, %cst_40 [0] : vector<8x128xf32> to vector<128xf32>
    %91 = vector.shape_cast %90 : vector<128xf32> to vector<1x128xf32>
    %92 = arith.addf %74, %88 : vector<1x128xf32>
    %93 = arith.addf %75, %91 : vector<1x128xf32>
    %c3_i32 = arith.constant 3 : i32
    %c8_i32_41 = arith.constant 8 : i32
    %94 = arith.muli %c3_i32, %c8_i32_41 : i32
    %95 = tpu.assume_multiple %94, 8 : i32
    %c0_42 = arith.constant 0 : index
    %96 = arith.index_cast %95 : i32 to index
    %c0_43 = arith.constant 0 : index
    %97 = vector.load %arg3[%c0_42, %96, %c0_43] : memref<1x50x128xbf16, #tpu.memory_space<vmem>>, vector<1x8x128xbf16>
    %98 = vector.shape_cast %97 : vector<1x8x128xbf16> to vector<8x128xbf16>
    %99 = arith.extf %98 : vector<8x128xbf16> to vector<8x128xf32>
    %100 = vector.broadcast %36 : vector<1x128xf32> to vector<8x128xf32>
    %101 = arith.mulf %99, %100 : vector<8x128xf32>
    %102 = vector.broadcast %38 : vector<1x128xf32> to vector<8x128xf32>
    %103 = arith.addf %101, %102 : vector<8x128xf32>
    %104 = math.tanh %103 : vector<8x128xf32>
    %cst_44 = arith.constant dense<0.000000e+00> : vector<128xf32>
    %105 = vector.multi_reduction <add>, %104, %cst_44 [0] : vector<8x128xf32> to vector<128xf32>
    %106 = vector.shape_cast %105 : vector<128xf32> to vector<1x128xf32>
    %107 = arith.mulf %104, %104 : vector<8x128xf32>
    %cst_45 = arith.constant dense<0.000000e+00> : vector<128xf32>
    %108 = vector.multi_reduction <add>, %107, %cst_45 [0] : vector<8x128xf32> to vector<128xf32>
    %109 = vector.shape_cast %108 : vector<128xf32> to vector<1x128xf32>
    %110 = arith.addf %92, %106 : vector<1x128xf32>
    %111 = arith.addf %93, %109 : vector<1x128xf32>
    %c4_i32 = arith.constant 4 : i32
    %c8_i32_46 = arith.constant 8 : i32
    %112 = arith.muli %c4_i32, %c8_i32_46 : i32
    %113 = tpu.assume_multiple %112, 8 : i32
    %c0_47 = arith.constant 0 : index
    %114 = arith.index_cast %113 : i32 to index
    %c0_48 = arith.constant 0 : index
    %115 = vector.load %arg3[%c0_47, %114, %c0_48] : memref<1x50x128xbf16, #tpu.memory_space<vmem>>, vector<1x8x128xbf16>
    %116 = vector.shape_cast %115 : vector<1x8x128xbf16> to vector<8x128xbf16>
    %117 = arith.extf %116 : vector<8x128xbf16> to vector<8x128xf32>
    %118 = vector.broadcast %36 : vector<1x128xf32> to vector<8x128xf32>
    %119 = arith.mulf %117, %118 : vector<8x128xf32>
    %120 = vector.broadcast %38 : vector<1x128xf32> to vector<8x128xf32>
    %121 = arith.addf %119, %120 : vector<8x128xf32>
    %122 = math.tanh %121 : vector<8x128xf32>
    %cst_49 = arith.constant dense<0.000000e+00> : vector<128xf32>
    %123 = vector.multi_reduction <add>, %122, %cst_49 [0] : vector<8x128xf32> to vector<128xf32>
    %124 = vector.shape_cast %123 : vector<128xf32> to vector<1x128xf32>
    %125 = arith.mulf %122, %122 : vector<8x128xf32>
    %cst_50 = arith.constant dense<0.000000e+00> : vector<128xf32>
    %126 = vector.multi_reduction <add>, %125, %cst_50 [0] : vector<8x128xf32> to vector<128xf32>
    %127 = vector.shape_cast %126 : vector<128xf32> to vector<1x128xf32>
    %128 = arith.addf %110, %124 : vector<1x128xf32>
    %129 = arith.addf %111, %127 : vector<1x128xf32>
    %c5_i32 = arith.constant 5 : i32
    %c8_i32_51 = arith.constant 8 : i32
    %130 = arith.muli %c5_i32, %c8_i32_51 : i32
    %131 = tpu.assume_multiple %130, 8 : i32
    %c0_52 = arith.constant 0 : index
    %132 = arith.index_cast %131 : i32 to index
    %c0_53 = arith.constant 0 : index
    %133 = vector.load %arg3[%c0_52, %132, %c0_53] : memref<1x50x128xbf16, #tpu.memory_space<vmem>>, vector<1x8x128xbf16>
    %134 = vector.shape_cast %133 : vector<1x8x128xbf16> to vector<8x128xbf16>
    %135 = arith.extf %134 : vector<8x128xbf16> to vector<8x128xf32>
    %136 = vector.broadcast %36 : vector<1x128xf32> to vector<8x128xf32>
    %137 = arith.mulf %135, %136 : vector<8x128xf32>
    %138 = vector.broadcast %38 : vector<1x128xf32> to vector<8x128xf32>
    %139 = arith.addf %137, %138 : vector<8x128xf32>
    %140 = math.tanh %139 : vector<8x128xf32>
    %cst_54 = arith.constant dense<0.000000e+00> : vector<128xf32>
    %141 = vector.multi_reduction <add>, %140, %cst_54 [0] : vector<8x128xf32> to vector<128xf32>
    %142 = vector.shape_cast %141 : vector<128xf32> to vector<1x128xf32>
    %143 = arith.mulf %140, %140 : vector<8x128xf32>
    %cst_55 = arith.constant dense<0.000000e+00> : vector<128xf32>
    %144 = vector.multi_reduction <add>, %143, %cst_55 [0] : vector<8x128xf32> to vector<128xf32>
    %145 = vector.shape_cast %144 : vector<128xf32> to vector<1x128xf32>
    %146 = arith.addf %128, %142 : vector<1x128xf32>
    %147 = arith.addf %129, %145 : vector<1x128xf32>
    %c6_i32 = arith.constant 6 : i32
    %c0_56 = arith.constant 0 : index
    %c48 = arith.constant 48 : index
    %c0_57 = arith.constant 0 : index
    %148 = vector.load %arg3[%c0_56, %c48, %c0_57] : memref<1x50x128xbf16, #tpu.memory_space<vmem>>, vector<1x2x128xbf16>
    %149 = vector.shape_cast %148 : vector<1x2x128xbf16> to vector<2x128xbf16>
    %150 = arith.extf %149 : vector<2x128xbf16> to vector<2x128xf32>
    %151 = vector.broadcast %36 : vector<1x128xf32> to vector<2x128xf32>
    %152 = arith.mulf %150, %151 : vector<2x128xf32>
    %153 = vector.broadcast %38 : vector<1x128xf32> to vector<2x128xf32>
    %154 = arith.addf %152, %153 : vector<2x128xf32>
    %155 = math.tanh %154 : vector<2x128xf32>
    %cst_58 = arith.constant dense<0.000000e+00> : vector<128xf32>
    %156 = vector.multi_reduction <add>, %155, %cst_58 [0] : vector<2x128xf32> to vector<128xf32>
    %157 = vector.shape_cast %156 : vector<128xf32> to vector<1x128xf32>
    %158 = arith.mulf %155, %155 : vector<2x128xf32>
    %cst_59 = arith.constant dense<0.000000e+00> : vector<128xf32>
    %159 = vector.multi_reduction <add>, %158, %cst_59 [0] : vector<2x128xf32> to vector<128xf32>
    %160 = vector.shape_cast %159 : vector<128xf32> to vector<1x128xf32>
    %161 = arith.addf %146, %157 : vector<1x128xf32>
    %162 = arith.addf %147, %160 : vector<1x128xf32>
    %163 = arith.mulf %161, %161 : vector<1x128xf32>
    %cst_60 = arith.constant 2.000000e-02 : f32
    %164 = vector.broadcast %cst_60 : f32 to vector<1x128xf32>
    %165 = arith.mulf %163, %164 : vector<1x128xf32>
    %166 = arith.subf %162, %165 : vector<1x128xf32>
    %cst_61 = arith.constant 0.0204081628 : f32
    %167 = vector.broadcast %cst_61 : f32 to vector<1x128xf32>
    %168 = arith.mulf %166, %167 : vector<1x128xf32>
    %cst_62 = arith.constant 2.500000e-01 : f32
    %169 = vector.broadcast %cst_62 : f32 to vector<1x128xf32>
    %170 = arith.mulf %169, %168 : vector<1x128xf32>
    %cst_63 = arith.constant 0.000000e+00 : f32
    %171 = vector.broadcast %cst_63 : f32 to vector<1x128xf32>
    %172 = arith.maximumf %170, %171 : vector<1x128xf32>
    %c0_64 = arith.constant 0 : index
    %c0_65 = arith.constant 0 : index
    %c0_66 = arith.constant 0 : index
    %173 = vector.load %arg12[%c0_64, %c0_65, %c0_66] : memref<1x1x128xf32, #tpu.memory_space<vmem>>, vector<1x1x128xf32>
    %174 = vector.shape_cast %173 : vector<1x1x128xf32> to vector<1x128xf32>
    %175 = vector.shape_cast %172 : vector<1x128xf32> to vector<1x1x128xf32>
    tpu.vector_store %arg12[%c0_64, %c0_65, %c0_66], %175 {strides = array<i32>} : memref<1x1x128xf32, #tpu.memory_space<vmem>>, vector<1x1x128xf32>,
    return
  }
  func.func @transform_0(%arg0: i32, %arg1: i32) -> (i32, i32, i32) {
    %c0_i32 = arith.constant 0 : i32
    %c0_i32_0 = arith.constant 0 : i32
    return %arg0, %c0_i32, %arg1 : i32, i32, i32
  }
  func.func @transform_1(%arg0: i32, %arg1: i32) -> (i32, i32, i32) {
    %c0_i32 = arith.constant 0 : i32
    %c0_i32_0 = arith.constant 0 : i32
    return %arg0, %c0_i32, %arg1 : i32, i32, i32
  }
  func.func @transform_2(%arg0: i32, %arg1: i32) -> (i32, i32, i32) {
    %c0_i32 = arith.constant 0 : i32
    %c0_i32_0 = arith.constant 0 : i32
    return %arg0, %c0_i32, %arg1 : i32, i32, i32
  }
  func.func @transform_3(%arg0: i32, %arg1: i32) -> (i32, i32) {
    %c0_i32 = arith.constant 0 : i32
    %c0_i32_0 = arith.constant 0 : i32
    %c0_i32_1 = arith.constant 0 : i32
    return %c0_i32, %c0_i32_0 : i32, i32
  }
  func.func @transform_4(%arg0: i32, %arg1: i32) -> (i32, i32) {
    %c0_i32 = arith.constant 0 : i32
    %c0_i32_0 = arith.constant 0 : i32
    %c0_i32_1 = arith.constant 0 : i32
    return %c0_i32, %c0_i32_0 : i32, i32
  }
  func.func @transform_5(%arg0: i32, %arg1: i32) -> (i32, i32) {
    %c0_i32 = arith.constant 0 : i32
    %c0_i32_0 = arith.constant 0 : i32
    %c0_i32_1 = arith.constant 0 : i32
    return %c0_i32, %c0_i32_0 : i32, i32
  }
  func.func @transform_6(%arg0: i32, %arg1: i32) -> (i32, i32) {
    %c0_i32 = arith.constant 0 : i32
    %c0_i32_0 = arith.constant 0 : i32
    %c0_i32_1 = arith.constant 0 : i32
    return %c0_i32, %c0_i32_0 : i32, i32
  }
  func.func @transform_7(%arg0: i32, %arg1: i32) -> (i32, i32) {
    %c0_i32 = arith.constant 0 : i32
    %c0_i32_0 = arith.constant 0 : i32
    %c0_i32_1 = arith.constant 0 : i32
    return %c0_i32, %c0_i32_0 : i32, i32
  }
  func.func @transform_8(%arg0: i32, %arg1: i32) -> (i32, i32, i32) {
    %c0_i32 = arith.constant 0 : i32
    %c0_i32_0 = arith.constant 0 : i32
    return %arg0, %c0_i32, %arg1 : i32, i32, i32
  }
  func.func @transform_9(%arg0: i32, %arg1: i32) -> (i32, i32, i32) {
    %c0_i32 = arith.constant 0 : i32
    %c0_i32_0 = arith.constant 0 : i32
    return %arg0, %c0_i32, %arg1 : i32, i32, i32
  }
  func.func @transform_10(%arg0: i32, %arg1: i32) -> (i32, i32, i32) {
    %c0_i32 = arith.constant 0 : i32
    %c0_i32_0 = arith.constant 0 : i32
    return %arg0, %c0_i32, %arg1 : i32, i32, i32
  }
}

</mosaic_0001>

<llo_original>
// kernel: get_uncertainty_forward.5
$region0: #{get_uncertainty_forward.5}
  #allocation0 [shape = 'u32[]', space=smem, size = 0x4, offset = 0x4, fixed_abs, tag = 'smem constant byte address 0x4 - core index']
  #allocation1 [shape = 'u32[144,128]{1,0:T(1,128)}', space=vmem, size = 0x12000, scoped, tag = 'internal scratch']
  %s0 = inlined_call_operand.vmem [shape: f32[2], index: 0, kind: input, shape index: {}]
  %s1 = inlined_call_operand.vmem [shape: bf16[2,32,256], index: 1, kind: input, shape index: {}]
  %s2 = inlined_call_operand.vmem [shape: f32[2,1,256], index: 2, kind: input, shape index: {}]
  %s3 = inlined_call_operand.vmem [shape: f32[2,32,256], index: 3, kind: output, shape index: {}]
  %s4 = sld [smem:[#allocation0]]
  $region124: #{get_uncertainty_forward.5} parent=0
    _
  %s6 = ssub.s32 1, %s4
  %s7 = scalar_select 0, %s6, %s4
  $region1: #{get_uncertainty_forward.5} parent=0
    #allocation2 [shape = 'u8[512]{0}', space=smem, size = 0x200, scoped, tag = 'input window, operand 0, single buffered']
    #allocation3 [shape = 's32[2]{0}', space=sflag, size = 0x8, scoped, tag = 'scoped memory for get_uncertainty_forward.5']
    #allocation4 [shape = 'u8[16384]{0}', space=vmem, size = 0x4000, scoped, tag = 'input window, operand 1']
    #allocation5 [shape = 'u8[32768]{0}', space=vmem, size = 0x8000, scoped, tag = 'output window, operand 0']
    %8 = vsyncpa [#allocation3], 0
    loop: start=0, step=1, limit=6
    $region2: #{get_uncertainty_forward.5} parent=1 // loop_pre_header
      _
    $region3: #{get_uncertainty_forward.5} parent=1 // loop_header
      %s10 = sphi 0, %s14
      %p11 = scmp.ge.s32.totalorder %s10, 6
      %s17 = sphi 0, %s29
      %s18 = sphi 0, %s25
      %s19 = sphi 0, %s17
      %s20 = sphi 0, %s18
      %s21 = sphi 0, %s19
      %s22 = sphi 0, %s20
      %s30 = sphi 0, %s30
      %s32 = sphi 0, %s30
      %s33 = sphi 0, %s32
      %s47 = sphi 0, %s33
      %s55 = sphi 0, %s57
      %s58 = sphi 0, %s55
      %s59 = sphi 0, %s58
      %s75 = sphi 0, %s59
      %s83 = sphi 0, %s85
      %s86 = sphi 0, %s83
      %s87 = sphi 0, %s86
      %s103 = sphi 0, %s87
      %s111 = sphi 0, %s113
      %s114 = sphi 0, %s111
      %s115 = sphi 0, %s114
      %s131 = sphi 0, %s115
    $region4: #{get_uncertainty_forward.5} parent=1 // loop_header_branch
      %13 = sbr.rel (%p11) target = $region8
    $region5: #{get_uncertainty_forward.5} parent=1 // loop_body
      %s15 = ssub.s32 %s10, 1
      %s16 = ssub.s32 %s10, 2
      %s23 = sadd.s32 1, %s18
      %p24 = scmp.ge.s32.totalorder %s23, 2
      %s25 = scalar_select %p24, 0, %s23
      %s26 = sadd.s32 1, %s17
      %s27 = scalar_select %p24, %s26, %s17
      %p28 = scmp.ge.s32.totalorder %s27, 2
      %s29 = scalar_select %p28, 0, %s27
      %s31 = sadd.s32 %s30, 1
      %p34 = scmp.eq.s32.totalorder %s10, 3
      %p35 = scmp.ne.s32.totalorder %s30, %s32
      %p36 = scmp.eq.s32.totalorder %s10, 0
      %p37 = por %p35, %p36
      %p38 = scmp.ne.s32.totalorder %s30, %s32
      %p39 = scmp.eq.s32.totalorder %s15, 3
      %p40 = por %p38, %p39
      %p41 = scmp.ne.s32.totalorder %s32, %s33
      %p42 = scmp.eq.s32.totalorder %s15, 0
      %p43 = por %p41, %p42
      %p44 = scmp.ne.s32.totalorder %s32, %s33
      %p45 = scmp.eq.s32.totalorder %s16, 3
      %p46 = por %p44, %p45
      %p48 = scmp.ne.s32.totalorder %s33, %s47
      %p49 = scmp.eq.s32.totalorder %s16, 0
      %p50 = por %p48, %p49
      %s51 = ssub.s32 %s17, %s29
      %s52 = ssub.s32 %s18, %s25
      %s53 = sor.u32 %s51, %s52
      %p54 = scmp.eq.s32.totalorder %s53, 0
      %s56 = sadd.s32 %s55, 1
      %s57 = scalar_select %p54, %s55, %s56
      %p60 = pneg %p54
      %p61 = scmp.eq.s32.totalorder %s10, 3
      %p62 = por %p60, %p61
      %p63 = scmp.ne.s32.totalorder %s55, %s58
      %p64 = scmp.eq.s32.totalorder %s10, 0
      %p65 = por %p63, %p64
      %p66 = scmp.ne.s32.totalorder %s55, %s58
      %p67 = scmp.eq.s32.totalorder %s15, 3
      %p68 = por %p66, %p67
      %p69 = scmp.ne.s32.totalorder %s58, %s59
      %p70 = scmp.eq.s32.totalorder %s15, 0
      %p71 = por %p69, %p70
      %p72 = scmp.ne.s32.totalorder %s58, %s59
      %p73 = scmp.eq.s32.totalorder %s16, 3
      %p74 = por %p72, %p73
      %p76 = scmp.ne.s32.totalorder %s59, %s75
      %p77 = scmp.eq.s32.totalorder %s16, 0
      %p78 = por %p76, %p77
      %s79 = ssub.s32 %s17, %s29
      %s80 = ssub.s32 %s18, %s25
      %s81 = sor.u32 %s79, %s80
      %p82 = scmp.eq.s32.totalorder %s81, 0
      %s84 = sadd.s32 %s83, 1
      %s85 = scalar_select %p82, %s83, %s84
      %p88 = pneg %p82
      %p89 = scmp.eq.s32.totalorder %s10, 3
      %p90 = por %p88, %p89
      %p91 = scmp.ne.s32.totalorder %s83, %s86
      %p92 = scmp.eq.s32.totalorder %s10, 0
      %p93 = por %p91, %p92
      %p94 = scmp.ne.s32.totalorder %s83, %s86
      %p95 = scmp.eq.s32.totalorder %s15, 3
      %p96 = por %p94, %p95
      %p97 = scmp.ne.s32.totalorder %s86, %s87
      %p98 = scmp.eq.s32.totalorder %s15, 0
      %p99 = por %p97, %p98
      %p100 = scmp.ne.s32.totalorder %s86, %s87
      %p101 = scmp.eq.s32.totalorder %s16, 3
      %p102 = por %p100, %p101
      %p104 = scmp.ne.s32.totalorder %s87, %s103
      %p105 = scmp.eq.s32.totalorder %s16, 0
      %p106 = por %p104, %p105
      %s107 = ssub.s32 %s17, %s29
      %s108 = ssub.s32 %s18, %s25
      %s109 = sor.u32 %s107, %s108
      %p110 = scmp.eq.s32.totalorder %s109, 0
      %s112 = sadd.s32 %s111, 1
      %s113 = scalar_select %p110, %s111, %s112
      %p116 = pneg %p110
      %p117 = scmp.eq.s32.totalorder %s10, 3
      %p118 = por %p116, %p117
      %p119 = scmp.ne.s32.totalorder %s111, %s114
      %p120 = scmp.eq.s32.totalorder %s10, 0
      %p121 = por %p119, %p120
      %p122 = scmp.ne.s32.totalorder %s111, %s114
      %p123 = scmp.eq.s32.totalorder %s15, 3
      %p124 = por %p122, %p123
      %p125 = scmp.ne.s32.totalorder %s114, %s115
      %p126 = scmp.eq.s32.totalorder %s15, 0
      %p127 = por %p125, %p126
      %p128 = scmp.ne.s32.totalorder %s114, %s115
      %p129 = scmp.eq.s32.totalorder %s16, 3
      %p130 = por %p128, %p129
      %p132 = scmp.ne.s32.totalorder %s115, %s131
      %p133 = scmp.eq.s32.totalorder %s16, 0
      %p134 = por %p132, %p133
      %p135 = scmp.le.s32.totalorder 1, %s10
      %p136 = scmp.lt.s32.totalorder %s10, 5
      %p137 = pnand %p135, %p136
      %p138 = pneg %p137
      // Predicated region
      $region9: #{get_uncertainty_forward.5} parent=5 // pred_check
        _
      $region10: #{get_uncertainty_forward.5} parent=5 // pred_check_branch
        %140 = sbr.rel (%p137) target = $region12
      $region11: #{get_uncertainty_forward.5} parent=5 // pred_region
        %s141 = ssub.s32 %s10, 1
        // Predicated region
        $region13: #{get_uncertainty_forward.5} parent=11 // pred_check
          %p142 = pneg %p43
        $region14: #{get_uncertainty_forward.5} parent=11 // pred_check_branch
          %144 = sbr.rel (%p142) target = $region16
        $region15: #{get_uncertainty_forward.5} parent=11 // pred_region
          %s146 = ssub.s32 16, 16
          %147 = vsyncadd [#allocation3], %s146
          %s149 = sshll.u32 %s0, 4
          %s150 = int_to_ptr.vmem [resolvable:$true] %s149
          %152 = dma.vmem_to_smem %s150, 16, [#allocation2], [#allocation3]
        $region16: #{get_uncertainty_forward.5} parent=11 // pred_fallthru
          _
      $region12: #{get_uncertainty_forward.5} parent=5 // pred_fallthru
        _
      %p153 = scmp.lt.s32.totalorder %s10, 4
      // Predicated region
      $region17: #{get_uncertainty_forward.5} parent=5 // pred_check
        %p154 = pneg %p153
      $region18: #{get_uncertainty_forward.5} parent=5 // pred_check_branch
        %156 = sbr.rel (%p154) target = $region20
      $region19: #{get_uncertainty_forward.5} parent=5 // pred_region
        // Predicated region
        $region21: #{get_uncertainty_forward.5} parent=19 // pred_check
          %p157 = pneg %p65
        $region22: #{get_uncertainty_forward.5} parent=19 // pred_check_branch
          %159 = sbr.rel (%p157) target = $region24
        $region23: #{get_uncertainty_forward.5} parent=19 // pred_region
          %s160 = sand.u32 %s55, 1
          %s161 = sand.u32 %s55, 1
          %s162 = smul.addr %s161, 16
          %s163 = scalar_lea.vmem [#allocation4], %s162
          %s164 = smul.addr %s17, 8
          %s165 = sadd.s32 %s18, %s164
          %s166 = smul.addr %s165, 4
          %s167 = scalar_lea.vmem %s1, %s166
          // Predicated region
          $region25: #{get_uncertainty_forward.5} parent=23 // pred_check
            _
          $region26: #{get_uncertainty_forward.5} parent=23 // pred_check_branch
            %169 = sbr.rel (0) target = $region28
          $region27: #{get_uncertainty_forward.5} parent=23 // pred_region
            // Predicated region
            $region29: #{get_uncertainty_forward.5} parent=27 // pred_check
              _
            $region30: #{get_uncertainty_forward.5} parent=27 // pred_check_branch
              %171 = sbr.rel target = $region32
            $region31: #{get_uncertainty_forward.5} parent=27 // pred_region
              // Predicated region
              $region44: #{get_uncertainty_forward.5} parent=31 // pred_check
                _
              $region45: #{get_uncertainty_forward.5} parent=31 // pred_check_branch
                %193 = sbr.rel (0) target = $region47
              $region46: #{get_uncertainty_forward.5} parent=31 // pred_region
                loop: start=0, step=1, limit=1
                $region48: #{get_uncertainty_forward.5} parent=46 // loop_pre_header
                  _
                $region49: #{get_uncertainty_forward.5} parent=46 // loop_header
                  %s195 = sphi 0, %s199
                  %p196 = scmp.ge.s32.totalorder %s195, 1
                  %s200 = sphi %s167, %s167
                  %s201 = sphi %s163, %s163
                $region50: #{get_uncertainty_forward.5} parent=46 // loop_header_branch
                  %198 = sbr.rel (%p196) target = $region54
                $region51: #{get_uncertainty_forward.5} parent=46 // loop_body
                  _
                $region52: #{get_uncertainty_forward.5} parent=46 // loop_footer
                  %s199 = sadd.s32 1, %s195
                $region53: #{get_uncertainty_forward.5} parent=46 // loop_footer_branch
                  %194 = sbr.rel target = $region49
                $region54: #{get_uncertainty_forward.5} parent=46 // loop_exit
                  _
                %s203 = ssub.s32 16, 1
                loop: start=0, step=1, limit=1
                $region55: #{get_uncertainty_forward.5} parent=46 // loop_pre_header
                  _
                $region56: #{get_uncertainty_forward.5} parent=46 // loop_header
                  %s205 = sphi 0, %s209
                  %p206 = scmp.ge.s32.totalorder %s205, 1
                  %s210 = sphi %s167, %s167
                  %s211 = sphi %s163, %s163
                $region57: #{get_uncertainty_forward.5} parent=46 // loop_header_branch
                  %208 = sbr.rel (%p206) target = $region61
                $region58: #{get_uncertainty_forward.5} parent=46 // loop_body
                  %v212 = vld [vmem:[%s210] sm:%s203]
                  %213 = vst [vmem:[%s211] sm:%s203] %v212
                  %v214 = vld [vmem:[%s210 + $0x8] sm:%s203]
                  %215 = vst [vmem:[%s211 + $0x4] sm:%s203] %v214
                  %v216 = vld [vmem:[%s210 + $0x10] sm:%s203]
                  %217 = vst [vmem:[%s211 + $0x8] sm:%s203] %v216
                  %v218 = vld [vmem:[%s210 + $0x18] sm:%s203]
                  %219 = vst [vmem:[%s211 + $0xc] sm:%s203] %v218
                $region59: #{get_uncertainty_forward.5} parent=46 // loop_footer
                  %s209 = sadd.s32 1, %s205
                $region60: #{get_uncertainty_forward.5} parent=46 // loop_footer_branch
                  %204 = sbr.rel target = $region56
                $region61: #{get_uncertainty_forward.5} parent=46 // loop_exit
                  _
              $region47: #{get_uncertainty_forward.5} parent=31 // pred_fallthru
                _
            $region32: #{get_uncertainty_forward.5} parent=27 // pred_fallthru
              _
            // Predicated region
            $region33: #{get_uncertainty_forward.5} parent=27 // pred_check
              _
            $region34: #{get_uncertainty_forward.5} parent=27 // pred_check_branch
              %173 = sbr.rel (0) target = $region36
            $region35: #{get_uncertainty_forward.5} parent=27 // pred_region
              %s175 = ssub.s32 16, 1
              loop: start=0, step=1, limit=1
              $region37: #{get_uncertainty_forward.5} parent=35 // loop_pre_header
                _
              $region38: #{get_uncertainty_forward.5} parent=35 // loop_header
                %s177 = sphi 0, %s181
                %p178 = scmp.ge.s32.totalorder %s177, 1
                %s182 = sphi %s167, %s167
                %s183 = sphi %s163, %s163
              $region39: #{get_uncertainty_forward.5} parent=35 // loop_header_branch
                %180 = sbr.rel (%p178) target = $region43
              $region40: #{get_uncertainty_forward.5} parent=35 // loop_body
                %v184 = vld [vmem:[%s182] sm:%s175]
                %185 = vst [vmem:[%s183] sm:%s175] %v184
                %v186 = vld [vmem:[%s182 + $0x8] sm:%s175]
                %187 = vst [vmem:[%s183 + $0x4] sm:%s175] %v186
                %v188 = vld [vmem:[%s182 + $0x10] sm:%s175]
                %189 = vst [vmem:[%s183 + $0x8] sm:%s175] %v188
                %v190 = vld [vmem:[%s182 + $0x18] sm:%s175]
                %191 = vst [vmem:[%s183 + $0xc] sm:%s175] %v190
              $region41: #{get_uncertainty_forward.5} parent=35 // loop_footer
                %s181 = sadd.s32 1, %s177
              $region42: #{get_uncertainty_forward.5} parent=35 // loop_footer_branch
                %176 = sbr.rel target = $region38
              $region43: #{get_uncertainty_forward.5} parent=35 // loop_exit
                _
            $region36: #{get_uncertainty_forward.5} parent=27 // pred_fallthru
              _
          $region28: #{get_uncertainty_forward.5} parent=23 // pred_fallthru
            _
          %220 = vnop
        $region24: #{get_uncertainty_forward.5} parent=19 // pred_fallthru
          _
        // Predicated region
        $region62: #{get_uncertainty_forward.5} parent=19 // pred_check
          %p221 = pneg %p93
        $region63: #{get_uncertainty_forward.5} parent=19 // pred_check_branch
          %223 = sbr.rel (%p221) target = $region65
        $region64: #{get_uncertainty_forward.5} parent=19 // pred_region
          %p224 = scmp.lt.s32.totalorder %s17, 1
          %s225 = scalar_select %p224, %s17, 1
          %p226 = scmp.lt.s32.totalorder %s18, 1
          %s227 = scalar_select %p226, %s18, 1
          %s228 = smul.addr %s225, 2
          %s229 = sadd.s32 %s227, %s228
          %s230 = scalar_lea.vmem %s2, %s229
        $region65: #{get_uncertainty_forward.5} parent=19 // pred_fallthru
          _
      $region20: #{get_uncertainty_forward.5} parent=5 // pred_fallthru
        _
      %p231 = scmp.le.s32.totalorder 1, %s10
      %p232 = scmp.lt.s32.totalorder %s10, 5
      %p233 = pnand %p231, %p232
      %p234 = pneg %p233
      // Predicated region
      $region66: #{get_uncertainty_forward.5} parent=5 // pred_check
        _
      $region67: #{get_uncertainty_forward.5} parent=5 // pred_check_branch
        %236 = sbr.rel (%p233) target = $region69
      $region68: #{get_uncertainty_forward.5} parent=5 // pred_region
        %s237 = ssub.s32 %s10, 1
        // Predicated region
        $region70: #{get_uncertainty_forward.5} parent=68 // pred_check
          %p238 = pneg %p43
        $region71: #{get_uncertainty_forward.5} parent=68 // pred_check_branch
          %240 = sbr.rel (%p238) target = $region73
        $region72: #{get_uncertainty_forward.5} parent=68 // pred_region
          %241 = dma.done [#allocation3], 16
        $region73: #{get_uncertainty_forward.5} parent=68 // pred_fallthru
          _
        %s242 = sand.u32 %s58, 1
        %s243 = sand.u32 %s58, 1
        %s244 = smul.addr %s243, 16
        %s245 = scalar_lea.vmem [#allocation4], %s244
        // Predicated region
        $region74: #{get_uncertainty_forward.5} parent=68 // pred_check
          %p246 = pneg %p71
        $region75: #{get_uncertainty_forward.5} parent=68 // pred_check_branch
          %248 = sbr.rel (%p246) target = $region77
        $region76: #{get_uncertainty_forward.5} parent=68 // pred_region
          _
        $region77: #{get_uncertainty_forward.5} parent=68 // pred_fallthru
          _
        %249 = sfence
        %p250 = pneg %p43
        %p251 = pneg %p40
        %s252 = sand.u32 %s58, 1
        %s253 = sand.u32 %s58, 1
        %s254 = smul.addr %s253, 16
        %s255 = scalar_lea.vmem [#allocation4], %s254
        %p256 = pneg %p71
        %p257 = pneg %p68
        %p258 = scmp.lt.s32.totalorder %s19, 1
        %s259 = scalar_select %p258, %s19, 1
        %p260 = scmp.lt.s32.totalorder %s20, 1
        %s261 = scalar_select %p260, %s20, 1
        %s262 = smul.addr %s259, 2
        %s263 = sadd.s32 %s261, %s262
        %s264 = scalar_lea.vmem %s2, %s263
        %p265 = pneg %p99
        %p266 = pneg %p96
        %p267 = pneg %p127
        %p268 = pneg %p124
        %s269 = sand.u32 %s114, 1
        %s270 = sand.u32 %s114, 1
        %s271 = smul.addr %s270, 32
        %s272 = scalar_lea.vmem [#allocation5], %s271
        %p273 = scmp.lt.s32.totalorder %s19, 1
        %s274 = scalar_select %p273, %s19, 1
        %p275 = scmp.lt.s32.totalorder %s20, 1
        %s276 = scalar_select %p275, %s20, 1
        %s277 = smul.addr %s274, 2
        %s278 = sadd.s32 %s276, %s277
        %s279 = scalar_lea.vmem %s2, %s278
        %s280 = sld [smem:[#allocation2]]
        %s281 = sld [smem:[#allocation2 + $0x1]]
        %v282 = vld [vmem:[%s279] sm:$0x1]
        %v283 = vstv %s280
        %v284 = vsub.f32 %v282, %v283
        %v285 = vstv %s281
        %v286 = vmul.f32 %v284, %v285
        %v287 = vld [vmem:[%s245] sm:$0xf]
        %v288 = vld [vmem:[%s245 + $0x4] sm:$0xf]
        %v289 = vld [vmem:[%s245 + $0x8] sm:$0xf]
        %v290 = vld [vmem:[%s245 + $0xc] sm:$0xf]
        %v291 = vunpack.c.l.bf16 %v287
        %v292 = vunpack.c.l.bf16 %v288
        %v293 = vunpack.c.l.bf16 %v289
        %v294 = vunpack.c.l.bf16 %v290
        %v295 = vsub.f32 1.0, %v286
        %v297 = vlaneseq
        %v298 = vshrl.u32 %v297, 7
        %v299 = vsub.s32 0, %v298
        %v300 = vrot.slane %v295, %v299
        %v302 = vmul.f32 %v291, %v300
        %v303 = vmul.f32 %v292, %v300
        %v304 = vmul.f32 %v293, %v300
        %v305 = vmul.f32 %v294, %v300
        %306 = vst [vmem:[%s272] sm:$0xff] %v302
        %307 = vst [vmem:[%s272 + $0x8] sm:$0xff] %v303
        %308 = vst [vmem:[%s272 + $0x10] sm:$0xff] %v304
        %309 = vst [vmem:[%s272 + $0x18] sm:$0xff] %v305
        %s310 = sand.u32 %s114, 1
        %s311 = sand.u32 %s114, 1
        %s312 = smul.addr %s311, 32
        %s313 = scalar_lea.vmem [#allocation5], %s312
        // Predicated region
        $region78: #{get_uncertainty_forward.5} parent=68 // pred_check
          %p314 = pneg %p124
        $region79: #{get_uncertainty_forward.5} parent=68 // pred_check_branch
          %316 = sbr.rel (%p314) target = $region81
        $region80: #{get_uncertainty_forward.5} parent=68 // pred_region
          %s317 = smul.addr %s19, 8
          %s318 = sadd.s32 %s20, %s317
          %s319 = smul.addr %s318, 8
          %s320 = scalar_lea.vmem %s3, %s319
          // Predicated region
          $region82: #{get_uncertainty_forward.5} parent=80 // pred_check
            _
          $region83: #{get_uncertainty_forward.5} parent=80 // pred_check_branch
            %322 = sbr.rel (0) target = $region85
          $region84: #{get_uncertainty_forward.5} parent=80 // pred_region
            // Predicated region
            $region86: #{get_uncertainty_forward.5} parent=84 // pred_check
              _
            $region87: #{get_uncertainty_forward.5} parent=84 // pred_check_branch
              %324 = sbr.rel (0) target = $region89
            $region88: #{get_uncertainty_forward.5} parent=84 // pred_region
              // Predicated region
              $region101: #{get_uncertainty_forward.5} parent=88 // pred_check
                _
              $region102: #{get_uncertainty_forward.5} parent=88 // pred_check_branch
                %346 = sbr.rel (0) target = $region104
              $region103: #{get_uncertainty_forward.5} parent=88 // pred_region
                loop: start=0, step=1, limit=1
                $region105: #{get_uncertainty_forward.5} parent=103 // loop_pre_header
                  _
                $region106: #{get_uncertainty_forward.5} parent=103 // loop_header
                  %s348 = sphi 0, %s352
                  %p349 = scmp.ge.s32.totalorder %s348, 1
                  %s353 = sphi %s313, %s313
                  %s354 = sphi %s320, %s320
                $region107: #{get_uncertainty_forward.5} parent=103 // loop_header_branch
                  %351 = sbr.rel (%p349) target = $region111
                $region108: #{get_uncertainty_forward.5} parent=103 // loop_body
                  %v355 = vld [vmem:[%s353] sm:$0xff]
                  %356 = vst [vmem:[%s354] sm:$0xff] %v355
                  %v357 = vld [vmem:[%s353 + $0x8] sm:$0xff]
                  %358 = vst [vmem:[%s354 + $0x10] sm:$0xff] %v357
                  %v359 = vld [vmem:[%s353 + $0x10] sm:$0xff]
                  %360 = vst [vmem:[%s354 + $0x20] sm:$0xff] %v359
                  %v361 = vld [vmem:[%s353 + $0x18] sm:$0xff]
                  %362 = vst [vmem:[%s354 + $0x30] sm:$0xff] %v361
                $region109: #{get_uncertainty_forward.5} parent=103 // loop_footer
                  %s352 = sadd.s32 1, %s348
                $region110: #{get_uncertainty_forward.5} parent=103 // loop_footer_branch
                  %347 = sbr.rel target = $region106
                $region111: #{get_uncertainty_forward.5} parent=103 // loop_exit
                  _
              $region104: #{get_uncertainty_forward.5} parent=88 // pred_fallthru
                _
              // Predicated region
              $region112: #{get_uncertainty_forward.5} parent=88 // pred_check
                _
              $region113: #{get_uncertainty_forward.5} parent=88 // pred_check_branch
                %364 = sbr.rel target = $region115
              $region114: #{get_uncertainty_forward.5} parent=88 // pred_region
                _
              $region115: #{get_uncertainty_forward.5} parent=88 // pred_fallthru
                _
            $region89: #{get_uncertainty_forward.5} parent=84 // pred_fallthru
              _
            // Predicated region
            $region90: #{get_uncertainty_forward.5} parent=84 // pred_check
              _
            $region91: #{get_uncertainty_forward.5} parent=84 // pred_check_branch
              %326 = sbr.rel target = $region93
            $region92: #{get_uncertainty_forward.5} parent=84 // pred_region
              %s328 = ssub.s32 256, 1
              loop: start=0, step=1, limit=1
              $region94: #{get_uncertainty_forward.5} parent=92 // loop_pre_header
                _
              $region95: #{get_uncertainty_forward.5} parent=92 // loop_header
                %s330 = sphi 0, %s334
                %p331 = scmp.ge.s32.totalorder %s330, 1
                %s335 = sphi %s313, %s313
                %s336 = sphi %s320, %s320
              $region96: #{get_uncertainty_forward.5} parent=92 // loop_header_branch
                %333 = sbr.rel (%p331) target = $region100
              $region97: #{get_uncertainty_forward.5} parent=92 // loop_body
                %v337 = vld [vmem:[%s335] sm:%s328]
                %338 = vst [vmem:[%s336] sm:%s328] %v337
                %v339 = vld [vmem:[%s335 + $0x8] sm:%s328]
                %340 = vst [vmem:[%s336 + $0x10] sm:%s328] %v339
                %v341 = vld [vmem:[%s335 + $0x10] sm:%s328]
                %342 = vst [vmem:[%s336 + $0x20] sm:%s328] %v341
                %v343 = vld [vmem:[%s335 + $0x18] sm:%s328]
                %344 = vst [vmem:[%s336 + $0x30] sm:%s328] %v343
              $region98: #{get_uncertainty_forward.5} parent=92 // loop_footer
                %s334 = sadd.s32 1, %s330
              $region99: #{get_uncertainty_forward.5} parent=92 // loop_footer_branch
                %329 = sbr.rel target = $region95
              $region100: #{get_uncertainty_forward.5} parent=92 // loop_exit
                _
            $region93: #{get_uncertainty_forward.5} parent=84 // pred_fallthru
              _
          $region85: #{get_uncertainty_forward.5} parent=80 // pred_fallthru
            _
          %365 = vnop
        $region81: #{get_uncertainty_forward.5} parent=68 // pred_fallthru
          _
      $region69: #{get_uncertainty_forward.5} parent=5 // pred_fallthru
        _
      %p366 = scmp.le.s32.totalorder 2, %s10
      // Predicated region
      $region116: #{get_uncertainty_forward.5} parent=5 // pred_check
        %p367 = pneg %p366
      $region117: #{get_uncertainty_forward.5} parent=5 // pred_check_branch
        %369 = sbr.rel (%p367) target = $region119
      $region118: #{get_uncertainty_forward.5} parent=5 // pred_region
        %s370 = ssub.s32 %s10, 2
        // Predicated region
        $region120: #{get_uncertainty_forward.5} parent=118 // pred_check
          %p371 = pneg %p130
        $region121: #{get_uncertainty_forward.5} parent=118 // pred_check_branch
          %373 = sbr.rel (%p371) target = $region123
        $region122: #{get_uncertainty_forward.5} parent=118 // pred_region
          %s374 = sand.u32 %s115, 1
          %s375 = sand.u32 %s115, 1
          %s376 = smul.addr %s375, 32
          %s377 = scalar_lea.vmem [#allocation5], %s376
        $region123: #{get_uncertainty_forward.5} parent=118 // pred_fallthru
          _
      $region119: #{get_uncertainty_forward.5} parent=5 // pred_fallthru
        _
    $region6: #{get_uncertainty_forward.5} parent=1 // loop_footer
      %s14 = sadd.s32 1, %s10
    $region7: #{get_uncertainty_forward.5} parent=1 // loop_footer_branch
      %9 = sbr.rel target = $region3
    $region8: #{get_uncertainty_forward.5} parent=1 // loop_exit
      _
    %378 = vsyncpa [#allocation3], 1
    %s379 = scalar_lea.sflag [#allocation3], 1
    %380 = vsyncpa %s379, 1

// kernel: get_uncertainty_forward.4
$region0: #{get_uncertainty_forward.4}
  #allocation0 [shape = 'u32[]', space=smem, size = 0x4, offset = 0x4, fixed_abs, tag = 'smem constant byte address 0x4 - core index']
  #allocation1 [shape = 'u32[144,128]{1,0:T(1,128)}', space=vmem, size = 0x12000, scoped, tag = 'internal scratch']
  %s0 = inlined_call_operand.vmem [shape: bf16[2,32,256], index: 0, kind: input, shape index: {}]
  %s1 = inlined_call_operand.vmem [shape: bf16[2,50,256], index: 1, kind: input, shape index: {}]
  %s2 = inlined_call_operand.vmem [shape: f32[2,1,256], index: 2, kind: input, shape index: {}]
  %s3 = inlined_call_operand.vmem [shape: bf16[32,32], index: 3, kind: input, shape index: {}]
  %s4 = inlined_call_operand.vmem [shape: f32[32,1], index: 4, kind: input, shape index: {}]
  %s5 = inlined_call_operand.vmem [shape: f32[32,1], index: 5, kind: input, shape index: {}]
  %s6 = inlined_call_operand.vmem [shape: bf16[48,32], index: 6, kind: input, shape index: {}]
  %s7 = inlined_call_operand.vmem [shape: f32[48,1], index: 7, kind: input, shape index: {}]
  %s8 = inlined_call_operand.vmem [shape: bf16[2,32,256], index: 8, kind: output, shape index: {0}]
  %s9 = inlined_call_operand.vmem [shape: f32[2,1,256], index: 9, kind: output, shape index: {1}]
  %s10 = inlined_call_operand.vmem [shape: f32[2,1,256], index: 10, kind: output, shape index: {2}]
  %11 = xla_tuple %s8, %s9, %s10
  %s12 = sld [smem:[#allocation0]]
  $region200: #{get_uncertainty_forward.4} parent=0
    _
  %s14 = ssub.s32 1, %s12
  %s15 = scalar_select 0, %s14, %s12
  $region1: #{get_uncertainty_forward.4} parent=0
    #allocation2 [shape = 'u8[16384]{0}', space=vmem, size = 0x4000, scoped, tag = 'input window, operand 0']
    #allocation3 [shape = 'u8[28672]{0}', space=vmem, size = 0x7000, scoped, tag = 'input window, operand 1']
    #allocation4 [shape = 'u8[16384]{0}', space=vmem, size = 0x4000, scoped, tag = 'output window, operand 0']
    loop: start=0, step=1, limit=6
    $region2: #{get_uncertainty_forward.4} parent=1 // loop_pre_header
      _
    $region3: #{get_uncertainty_forward.4} parent=1 // loop_header
      %s17 = sphi 0, %s21
      %p18 = scmp.ge.s32.totalorder %s17, 6
      %s24 = sphi 0, %s36
      %s25 = sphi 0, %s32
      %s26 = sphi 0, %s24
      %s27 = sphi 0, %s25
      %s28 = sphi 0, %s26
      %s29 = sphi 0, %s27
      %s41 = sphi 0, %s43
      %s44 = sphi 0, %s41
      %s45 = sphi 0, %s44
      %s61 = sphi 0, %s45
      %s69 = sphi 0, %s71
      %s72 = sphi 0, %s69
      %s73 = sphi 0, %s72
      %s89 = sphi 0, %s73
      %s97 = sphi 0, %s99
      %s100 = sphi 0, %s97
      %s101 = sphi 0, %s100
      %s117 = sphi 0, %s101
      %s121 = sphi 0, %s121
      %s123 = sphi 0, %s121
      %s124 = sphi 0, %s123
      %s138 = sphi 0, %s124
      %s142 = sphi 0, %s142
      %s144 = sphi 0, %s142
      %s145 = sphi 0, %s144
      %s159 = sphi 0, %s145
      %s163 = sphi 0, %s163
      %s165 = sphi 0, %s163
      %s166 = sphi 0, %s165
      %s180 = sphi 0, %s166
      %s184 = sphi 0, %s184
      %s186 = sphi 0, %s184
      %s187 = sphi 0, %s186
      %s201 = sphi 0, %s187
      %s205 = sphi 0, %s205
      %s207 = sphi 0, %s205
      %s208 = sphi 0, %s207
      %s222 = sphi 0, %s208
      %s230 = sphi 0, %s232
      %s233 = sphi 0, %s230
      %s234 = sphi 0, %s233
      %s250 = sphi 0, %s234
      %s258 = sphi 0, %s260
      %s261 = sphi 0, %s258
      %s262 = sphi 0, %s261
      %s278 = sphi 0, %s262
      %s286 = sphi 0, %s288
      %s289 = sphi 0, %s286
      %s290 = sphi 0, %s289
      %s306 = sphi 0, %s290
    $region4: #{get_uncertainty_forward.4} parent=1 // loop_header_branch
      %20 = sbr.rel (%p18) target = $region8
    $region5: #{get_uncertainty_forward.4} parent=1 // loop_body
      %s22 = ssub.s32 %s17, 1
      %s23 = ssub.s32 %s17, 2
      %s30 = sadd.s32 1, %s25
      %p31 = scmp.ge.s32.totalorder %s30, 2
      %s32 = scalar_select %p31, 0, %s30
      %s33 = sadd.s32 1, %s24
      %s34 = scalar_select %p31, %s33, %s24
      %p35 = scmp.ge.s32.totalorder %s34, 2
      %s36 = scalar_select %p35, 0, %s34
      %s37 = ssub.s32 %s24, %s36
      %s38 = ssub.s32 %s25, %s32
      %s39 = sor.u32 %s37, %s38
      %p40 = scmp.eq.s32.totalorder %s39, 0
      %s42 = sadd.s32 %s41, 1
      %s43 = scalar_select %p40, %s41, %s42
      %p46 = pneg %p40
      %p47 = scmp.eq.s32.totalorder %s17, 3
      %p48 = por %p46, %p47
      %p49 = scmp.ne.s32.totalorder %s41, %s44
      %p50 = scmp.eq.s32.totalorder %s17, 0
      %p51 = por %p49, %p50
      %p52 = scmp.ne.s32.totalorder %s41, %s44
      %p53 = scmp.eq.s32.totalorder %s22, 3
      %p54 = por %p52, %p53
      %p55 = scmp.ne.s32.totalorder %s44, %s45
      %p56 = scmp.eq.s32.totalorder %s22, 0
      %p57 = por %p55, %p56
      %p58 = scmp.ne.s32.totalorder %s44, %s45
      %p59 = scmp.eq.s32.totalorder %s23, 3
      %p60 = por %p58, %p59
      %p62 = scmp.ne.s32.totalorder %s45, %s61
      %p63 = scmp.eq.s32.totalorder %s23, 0
      %p64 = por %p62, %p63
      %s65 = ssub.s32 %s24, %s36
      %s66 = ssub.s32 %s25, %s32
      %s67 = sor.u32 %s65, %s66
      %p68 = scmp.eq.s32.totalorder %s67, 0
      %s70 = sadd.s32 %s69, 1
      %s71 = scalar_select %p68, %s69, %s70
      %p74 = pneg %p68
      %p75 = scmp.eq.s32.totalorder %s17, 3
      %p76 = por %p74, %p75
      %p77 = scmp.ne.s32.totalorder %s69, %s72
      %p78 = scmp.eq.s32.totalorder %s17, 0
      %p79 = por %p77, %p78
      %p80 = scmp.ne.s32.totalorder %s69, %s72
      %p81 = scmp.eq.s32.totalorder %s22, 3
      %p82 = por %p80, %p81
      %p83 = scmp.ne.s32.totalorder %s72, %s73
      %p84 = scmp.eq.s32.totalorder %s22, 0
      %p85 = por %p83, %p84
      %p86 = scmp.ne.s32.totalorder %s72, %s73
      %p87 = scmp.eq.s32.totalorder %s23, 3
      %p88 = por %p86, %p87
      %p90 = scmp.ne.s32.totalorder %s73, %s89
      %p91 = scmp.eq.s32.totalorder %s23, 0
      %p92 = por %p90, %p91
      %s93 = ssub.s32 %s24, %s36
      %s94 = ssub.s32 %s25, %s32
      %s95 = sor.u32 %s93, %s94
      %p96 = scmp.eq.s32.totalorder %s95, 0
      %s98 = sadd.s32 %s97, 1
      %s99 = scalar_select %p96, %s97, %s98
      %p102 = pneg %p96
      %p103 = scmp.eq.s32.totalorder %s17, 3
      %p104 = por %p102, %p103
      %p105 = scmp.ne.s32.totalorder %s97, %s100
      %p106 = scmp.eq.s32.totalorder %s17, 0
      %p107 = por %p105, %p106
      %p108 = scmp.ne.s32.totalorder %s97, %s100
      %p109 = scmp.eq.s32.totalorder %s22, 3
      %p110 = por %p108, %p109
      %p111 = scmp.ne.s32.totalorder %s100, %s101
      %p112 = scmp.eq.s32.totalorder %s22, 0
      %p113 = por %p111, %p112
      %p114 = scmp.ne.s32.totalorder %s100, %s101
      %p115 = scmp.eq.s32.totalorder %s23, 3
      %p116 = por %p114, %p115
      %p118 = scmp.ne.s32.totalorder %s101, %s117
      %p119 = scmp.eq.s32.totalorder %s23, 0
      %p120 = por %p118, %p119
      %s122 = sadd.s32 %s121, 1
      %p125 = scmp.eq.s32.totalorder %s17, 3
      %p126 = scmp.ne.s32.totalorder %s121, %s123
      %p127 = scmp.eq.s32.totalorder %s17, 0
      %p128 = por %p126, %p127
      %p129 = scmp.ne.s32.totalorder %s121, %s123
      %p130 = scmp.eq.s32.totalorder %s22, 3
      %p131 = por %p129, %p130
      %p132 = scmp.ne.s32.totalorder %s123, %s124
      %p133 = scmp.eq.s32.totalorder %s22, 0
      %p134 = por %p132, %p133
      %p135 = scmp.ne.s32.totalorder %s123, %s124
      %p136 = scmp.eq.s32.totalorder %s23, 3
      %p137 = por %p135, %p136
      %p139 = scmp.ne.s32.totalorder %s124, %s138
      %p140 = scmp.eq.s32.totalorder %s23, 0
      %p141 = por %p139, %p140
      %s143 = sadd.s32 %s142, 1
      %p146 = scmp.eq.s32.totalorder %s17, 3
      %p147 = scmp.ne.s32.totalorder %s142, %s144
      %p148 = scmp.eq.s32.totalorder %s17, 0
      %p149 = por %p147, %p148
      %p150 = scmp.ne.s32.totalorder %s142, %s144
      %p151 = scmp.eq.s32.totalorder %s22, 3
      %p152 = por %p150, %p151
      %p153 = scmp.ne.s32.totalorder %s144, %s145
      %p154 = scmp.eq.s32.totalorder %s22, 0
      %p155 = por %p153, %p154
      %p156 = scmp.ne.s32.totalorder %s144, %s145
      %p157 = scmp.eq.s32.totalorder %s23, 3
      %p158 = por %p156, %p157
      %p160 = scmp.ne.s32.totalorder %s145, %s159
      %p161 = scmp.eq.s32.totalorder %s23, 0
      %p162 = por %p160, %p161
      %s164 = sadd.s32 %s163, 1
      %p167 = scmp.eq.s32.totalorder %s17, 3
      %p168 = scmp.ne.s32.totalorder %s163, %s165
      %p169 = scmp.eq.s32.totalorder %s17, 0
      %p170 = por %p168, %p169
      %p171 = scmp.ne.s32.totalorder %s163, %s165
      %p172 = scmp.eq.s32.totalorder %s22, 3
      %p173 = por %p171, %p172
      %p174 = scmp.ne.s32.totalorder %s165, %s166
      %p175 = scmp.eq.s32.totalorder %s22, 0
      %p176 = por %p174, %p175
      %p177 = scmp.ne.s32.totalorder %s165, %s166
      %p178 = scmp.eq.s32.totalorder %s23, 3
      %p179 = por %p177, %p178
      %p181 = scmp.ne.s32.totalorder %s166, %s180
      %p182 = scmp.eq.s32.totalorder %s23, 0
      %p183 = por %p181, %p182
      %s185 = sadd.s32 %s184, 1
      %p188 = scmp.eq.s32.totalorder %s17, 3
      %p189 = scmp.ne.s32.totalorder %s184, %s186
      %p190 = scmp.eq.s32.totalorder %s17, 0
      %p191 = por %p189, %p190
      %p192 = scmp.ne.s32.totalorder %s184, %s186
      %p193 = scmp.eq.s32.totalorder %s22, 3
      %p194 = por %p192, %p193
      %p195 = scmp.ne.s32.totalorder %s186, %s187
      %p196 = scmp.eq.s32.totalorder %s22, 0
      %p197 = por %p195, %p196
      %p198 = scmp.ne.s32.totalorder %s186, %s187
      %p199 = scmp.eq.s32.totalorder %s23, 3
      %p200 = por %p198, %p199
      %p202 = scmp.ne.s32.totalorder %s187, %s201
      %p203 = scmp.eq.s32.totalorder %s23, 0
      %p204 = por %p202, %p203
      %s206 = sadd.s32 %s205, 1
      %p209 = scmp.eq.s32.totalorder %s17, 3
      %p210 = scmp.ne.s32.totalorder %s205, %s207
      %p211 = scmp.eq.s32.totalorder %s17, 0
      %p212 = por %p210, %p211
      %p213 = scmp.ne.s32.totalorder %s205, %s207
      %p214 = scmp.eq.s32.totalorder %s22, 3
      %p215 = por %p213, %p214
      %p216 = scmp.ne.s32.totalorder %s207, %s208
      %p217 = scmp.eq.s32.totalorder %s22, 0
      %p218 = por %p216, %p217
      %p219 = scmp.ne.s32.totalorder %s207, %s208
      %p220 = scmp.eq.s32.totalorder %s23, 3
      %p221 = por %p219, %p220
      %p223 = scmp.ne.s32.totalorder %s208, %s222
      %p224 = scmp.eq.s32.totalorder %s23, 0
      %p225 = por %p223, %p224
      %s226 = ssub.s32 %s24, %s36
      %s227 = ssub.s32 %s25, %s32
      %s228 = sor.u32 %s226, %s227
      %p229 = scmp.eq.s32.totalorder %s228, 0
      %s231 = sadd.s32 %s230, 1
      %s232 = scalar_select %p229, %s230, %s231
      %p235 = pneg %p229
      %p236 = scmp.eq.s32.totalorder %s17, 3
      %p237 = por %p235, %p236
      %p238 = scmp.ne.s32.totalorder %s230, %s233
      %p239 = scmp.eq.s32.totalorder %s17, 0
      %p240 = por %p238, %p239
      %p241 = scmp.ne.s32.totalorder %s230, %s233
      %p242 = scmp.eq.s32.totalorder %s22, 3
      %p243 = por %p241, %p242
      %p244 = scmp.ne.s32.totalorder %s233, %s234
      %p245 = scmp.eq.s32.totalorder %s22, 0
      %p246 = por %p244, %p245
      %p247 = scmp.ne.s32.totalorder %s233, %s234
      %p248 = scmp.eq.s32.totalorder %s23, 3
      %p249 = por %p247, %p248
      %p251 = scmp.ne.s32.totalorder %s234, %s250
      %p252 = scmp.eq.s32.totalorder %s23, 0
      %p253 = por %p251, %p252
      %s254 = ssub.s32 %s24, %s36
      %s255 = ssub.s32 %s25, %s32
      %s256 = sor.u32 %s254, %s255
      %p257 = scmp.eq.s32.totalorder %s256, 0
      %s259 = sadd.s32 %s258, 1
      %s260 = scalar_select %p257, %s258, %s259
      %p263 = pneg %p257
      %p264 = scmp.eq.s32.totalorder %s17, 3
      %p265 = por %p263, %p264
      %p266 = scmp.ne.s32.totalorder %s258, %s261
      %p267 = scmp.eq.s32.totalorder %s17, 0
      %p268 = por %p266, %p267
      %p269 = scmp.ne.s32.totalorder %s258, %s261
      %p270 = scmp.eq.s32.totalorder %s22, 3
      %p271 = por %p269, %p270
      %p272 = scmp.ne.s32.totalorder %s261, %s262
      %p273 = scmp.eq.s32.totalorder %s22, 0
      %p274 = por %p272, %p273
      %p275 = scmp.ne.s32.totalorder %s261, %s262
      %p276 = scmp.eq.s32.totalorder %s23, 3
      %p277 = por %p275, %p276
      %p279 = scmp.ne.s32.totalorder %s262, %s278
      %p280 = scmp.eq.s32.totalorder %s23, 0
      %p281 = por %p279, %p280
      %s282 = ssub.s32 %s24, %s36
      %s283 = ssub.s32 %s25, %s32
      %s284 = sor.u32 %s282, %s283
      %p285 = scmp.eq.s32.totalorder %s284, 0
      %s287 = sadd.s32 %s286, 1
      %s288 = scalar_select %p285, %s286, %s287
      %p291 = pneg %p285
      %p292 = scmp.eq.s32.totalorder %s17, 3
      %p293 = por %p291, %p292
      %p294 = scmp.ne.s32.totalorder %s286, %s289
      %p295 = scmp.eq.s32.totalorder %s17, 0
      %p296 = por %p294, %p295
      %p297 = scmp.ne.s32.totalorder %s286, %s289
      %p298 = scmp.eq.s32.totalorder %s22, 3
      %p299 = por %p297, %p298
      %p300 = scmp.ne.s32.totalorder %s289, %s290
      %p301 = scmp.eq.s32.totalorder %s22, 0
      %p302 = por %p300, %p301
      %p303 = scmp.ne.s32.totalorder %s289, %s290
      %p304 = scmp.eq.s32.totalorder %s23, 3
      %p305 = por %p303, %p304
      %p307 = scmp.ne.s32.totalorder %s290, %s306
      %p308 = scmp.eq.s32.totalorder %s23, 0
      %p309 = por %p307, %p308
      %p310 = scmp.le.s32.totalorder 1, %s17
      %p311 = scmp.lt.s32.totalorder %s17, 5
      %p312 = pnand %p310, %p311
      %p313 = pneg %p312
      // Predicated region
      $region9: #{get_uncertainty_forward.4} parent=5 // pred_check
        _
      $region10: #{get_uncertainty_forward.4} parent=5 // pred_check_branch
        %315 = sbr.rel (%p312) target = $region12
      $region11: #{get_uncertainty_forward.4} parent=5 // pred_region
        %s316 = ssub.s32 %s17, 1
        // Predicated region
        $region13: #{get_uncertainty_forward.4} parent=11 // pred_check
          %p317 = pneg %p134
        $region14: #{get_uncertainty_forward.4} parent=11 // pred_check_branch
          %319 = sbr.rel (%p317) target = $region16
        $region15: #{get_uncertainty_forward.4} parent=11 // pred_region
          _
        $region16: #{get_uncertainty_forward.4} parent=11 // pred_fallthru
          _
        // Predicated region
        $region17: #{get_uncertainty_forward.4} parent=11 // pred_check
          %p320 = pneg %p155
        $region18: #{get_uncertainty_forward.4} parent=11 // pred_check_branch
          %322 = sbr.rel (%p320) target = $region20
        $region19: #{get_uncertainty_forward.4} parent=11 // pred_region
          _
        $region20: #{get_uncertainty_forward.4} parent=11 // pred_fallthru
          _
        // Predicated region
        $region21: #{get_uncertainty_forward.4} parent=11 // pred_check
          %p323 = pneg %p176
        $region22: #{get_uncertainty_forward.4} parent=11 // pred_check_branch
          %325 = sbr.rel (%p323) target = $region24
        $region23: #{get_uncertainty_forward.4} parent=11 // pred_region
          _
        $region24: #{get_uncertainty_forward.4} parent=11 // pred_fallthru
          _
        // Predicated region
        $region25: #{get_uncertainty_forward.4} parent=11 // pred_check
          %p326 = pneg %p197
        $region26: #{get_uncertainty_forward.4} parent=11 // pred_check_branch
          %328 = sbr.rel (%p326) target = $region28
        $region27: #{get_uncertainty_forward.4} parent=11 // pred_region
          _
        $region28: #{get_uncertainty_forward.4} parent=11 // pred_fallthru
          _
        // Predicated region
        $region29: #{get_uncertainty_forward.4} parent=11 // pred_check
          %p329 = pneg %p218
        $region30: #{get_uncertainty_forward.4} parent=11 // pred_check_branch
          %331 = sbr.rel (%p329) target = $region32
        $region31: #{get_uncertainty_forward.4} parent=11 // pred_region
          _
        $region32: #{get_uncertainty_forward.4} parent=11 // pred_fallthru
          _
      $region12: #{get_uncertainty_forward.4} parent=5 // pred_fallthru
        _
      %p332 = scmp.lt.s32.totalorder %s17, 4
      // Predicated region
      $region33: #{get_uncertainty_forward.4} parent=5 // pred_check
        %p333 = pneg %p332
      $region34: #{get_uncertainty_forward.4} parent=5 // pred_check_branch
        %335 = sbr.rel (%p333) target = $region36
      $region35: #{get_uncertainty_forward.4} parent=5 // pred_region
        // Predicated region
        $region37: #{get_uncertainty_forward.4} parent=35 // pred_check
          %p336 = pneg %p51
        $region38: #{get_uncertainty_forward.4} parent=35 // pred_check_branch
          %338 = sbr.rel (%p336) target = $region40
        $region39: #{get_uncertainty_forward.4} parent=35 // pred_region
          %s339 = sand.u32 %s41, 1
          %s340 = sand.u32 %s41, 1
          %s341 = smul.addr %s340, 16
          %s342 = scalar_lea.vmem [#allocation2], %s341
          %s343 = smul.addr %s24, 8
          %s344 = sadd.s32 %s25, %s343
          %s345 = smul.addr %s344, 4
          %s346 = scalar_lea.vmem %s0, %s345
          // Predicated region
          $region41: #{get_uncertainty_forward.4} parent=39 // pred_check
            _
          $region42: #{get_uncertainty_forward.4} parent=39 // pred_check_branch
            %348 = sbr.rel (0) target = $region44
          $region43: #{get_uncertainty_forward.4} parent=39 // pred_region
            // Predicated region
            $region45: #{get_uncertainty_forward.4} parent=43 // pred_check
              _
            $region46: #{get_uncertainty_forward.4} parent=43 // pred_check_branch
              %350 = sbr.rel target = $region48
            $region47: #{get_uncertainty_forward.4} parent=43 // pred_region
              // Predicated region
              $region60: #{get_uncertainty_forward.4} parent=47 // pred_check
                _
              $region61: #{get_uncertainty_forward.4} parent=47 // pred_check_branch
                %372 = sbr.rel (0) target = $region63
              $region62: #{get_uncertainty_forward.4} parent=47 // pred_region
                loop: start=0, step=1, limit=1
                $region64: #{get_uncertainty_forward.4} parent=62 // loop_pre_header
                  _
                $region65: #{get_uncertainty_forward.4} parent=62 // loop_header
                  %s374 = sphi 0, %s378
                  %p375 = scmp.ge.s32.totalorder %s374, 1
                  %s379 = sphi %s346, %s346
                  %s380 = sphi %s342, %s342
                $region66: #{get_uncertainty_forward.4} parent=62 // loop_header_branch
                  %377 = sbr.rel (%p375) target = $region70
                $region67: #{get_uncertainty_forward.4} parent=62 // loop_body
                  _
                $region68: #{get_uncertainty_forward.4} parent=62 // loop_footer
                  %s378 = sadd.s32 1, %s374
                $region69: #{get_uncertainty_forward.4} parent=62 // loop_footer_branch
                  %373 = sbr.rel target = $region65
                $region70: #{get_uncertainty_forward.4} parent=62 // loop_exit
                  _
                %s382 = ssub.s32 16, 1
                loop: start=0, step=1, limit=1
                $region71: #{get_uncertainty_forward.4} parent=62 // loop_pre_header
                  _
                $region72: #{get_uncertainty_forward.4} parent=62 // loop_header
                  %s384 = sphi 0, %s388
                  %p385 = scmp.ge.s32.totalorder %s384, 1
                  %s389 = sphi %s346, %s346
                  %s390 = sphi %s342, %s342
                $region73: #{get_uncertainty_forward.4} parent=62 // loop_header_branch
                  %387 = sbr.rel (%p385) target = $region77
                $region74: #{get_uncertainty_forward.4} parent=62 // loop_body
                  %v391 = vld [vmem:[%s389] sm:%s382]
                  %392 = vst [vmem:[%s390] sm:%s382] %v391
                  %v393 = vld [vmem:[%s389 + $0x8] sm:%s382]
                  %394 = vst [vmem:[%s390 + $0x4] sm:%s382] %v393
                  %v395 = vld [vmem:[%s389 + $0x10] sm:%s382]
                  %396 = vst [vmem:[%s390 + $0x8] sm:%s382] %v395
                  %v397 = vld [vmem:[%s389 + $0x18] sm:%s382]
                  %398 = vst [vmem:[%s390 + $0xc] sm:%s382] %v397
                $region75: #{get_uncertainty_forward.4} parent=62 // loop_footer
                  %s388 = sadd.s32 1, %s384
                $region76: #{get_uncertainty_forward.4} parent=62 // loop_footer_branch
                  %383 = sbr.rel target = $region72
                $region77: #{get_uncertainty_forward.4} parent=62 // loop_exit
                  _
              $region63: #{get_uncertainty_forward.4} parent=47 // pred_fallthru
                _
            $region48: #{get_uncertainty_forward.4} parent=43 // pred_fallthru
              _
            // Predicated region
            $region49: #{get_uncertainty_forward.4} parent=43 // pred_check
              _
            $region50: #{get_uncertainty_forward.4} parent=43 // pred_check_branch
              %352 = sbr.rel (0) target = $region52
            $region51: #{get_uncertainty_forward.4} parent=43 // pred_region
              %s354 = ssub.s32 16, 1
              loop: start=0, step=1, limit=1
              $region53: #{get_uncertainty_forward.4} parent=51 // loop_pre_header
                _
              $region54: #{get_uncertainty_forward.4} parent=51 // loop_header
                %s356 = sphi 0, %s360
                %p357 = scmp.ge.s32.totalorder %s356, 1
                %s361 = sphi %s346, %s346
                %s362 = sphi %s342, %s342
              $region55: #{get_uncertainty_forward.4} parent=51 // loop_header_branch
                %359 = sbr.rel (%p357) target = $region59
              $region56: #{get_uncertainty_forward.4} parent=51 // loop_body
                %v363 = vld [vmem:[%s361] sm:%s354]
                %364 = vst [vmem:[%s362] sm:%s354] %v363
                %v365 = vld [vmem:[%s361 + $0x8] sm:%s354]
                %366 = vst [vmem:[%s362 + $0x4] sm:%s354] %v365
                %v367 = vld [vmem:[%s361 + $0x10] sm:%s354]
                %368 = vst [vmem:[%s362 + $0x8] sm:%s354] %v367
                %v369 = vld [vmem:[%s361 + $0x18] sm:%s354]
                %370 = vst [vmem:[%s362 + $0xc] sm:%s354] %v369
              $region57: #{get_uncertainty_forward.4} parent=51 // loop_footer
                %s360 = sadd.s32 1, %s356
              $region58: #{get_uncertainty_forward.4} parent=51 // loop_footer_branch
                %355 = sbr.rel target = $region54
              $region59: #{get_uncertainty_forward.4} parent=51 // loop_exit
                _
            $region52: #{get_uncertainty_forward.4} parent=43 // pred_fallthru
              _
          $region44: #{get_uncertainty_forward.4} parent=39 // pred_fallthru
            _
          %399 = vnop
        $region40: #{get_uncertainty_forward.4} parent=35 // pred_fallthru
          _
        // Predicated region
        $region78: #{get_uncertainty_forward.4} parent=35 // pred_check
          %p400 = pneg %p79
        $region79: #{get_uncertainty_forward.4} parent=35 // pred_check_branch
          %402 = sbr.rel (%p400) target = $region81
        $region80: #{get_uncertainty_forward.4} parent=35 // pred_region
          %s403 = sand.u32 %s69, 1
          %s404 = sand.u32 %s69, 1
          %s405 = smul.addr %s404, 28
          %s406 = scalar_lea.vmem [#allocation3], %s405
          %s407 = smul.addr %s24, 14
          %s408 = sadd.s32 %s25, %s407
          %s409 = smul.addr %s408, 4
          %s410 = scalar_lea.vmem %s1, %s409
          // Predicated region
          $region82: #{get_uncertainty_forward.4} parent=80 // pred_check
            _
          $region83: #{get_uncertainty_forward.4} parent=80 // pred_check_branch
            %412 = sbr.rel (0) target = $region85
          $region84: #{get_uncertainty_forward.4} parent=80 // pred_region
            // Predicated region
            $region86: #{get_uncertainty_forward.4} parent=84 // pred_check
              _
            $region87: #{get_uncertainty_forward.4} parent=84 // pred_check_branch
              %414 = sbr.rel target = $region89
            $region88: #{get_uncertainty_forward.4} parent=84 // pred_region
              // Predicated region
              $region101: #{get_uncertainty_forward.4} parent=88 // pred_check
                _
              $region102: #{get_uncertainty_forward.4} parent=88 // pred_check_branch
                %442 = sbr.rel (0) target = $region104
              $region103: #{get_uncertainty_forward.4} parent=88 // pred_region
                loop: start=0, step=1, limit=1
                $region105: #{get_uncertainty_forward.4} parent=103 // loop_pre_header
                  _
                $region106: #{get_uncertainty_forward.4} parent=103 // loop_header
                  %s444 = sphi 0, %s448
                  %p445 = scmp.ge.s32.totalorder %s444, 1
                  %s449 = sphi %s410, %s410
                  %s450 = sphi %s406, %s406
                $region107: #{get_uncertainty_forward.4} parent=103 // loop_header_branch
                  %447 = sbr.rel (%p445) target = $region111
                $region108: #{get_uncertainty_forward.4} parent=103 // loop_body
                  _
                $region109: #{get_uncertainty_forward.4} parent=103 // loop_footer
                  %s448 = sadd.s32 1, %s444
                $region110: #{get_uncertainty_forward.4} parent=103 // loop_footer_branch
                  %443 = sbr.rel target = $region106
                $region111: #{get_uncertainty_forward.4} parent=103 // loop_exit
                  _
                %s452 = ssub.s32 16, 1
                loop: start=0, step=1, limit=1
                $region112: #{get_uncertainty_forward.4} parent=103 // loop_pre_header
                  _
                $region113: #{get_uncertainty_forward.4} parent=103 // loop_header
                  %s454 = sphi 0, %s458
                  %p455 = scmp.ge.s32.totalorder %s454, 1
                  %s459 = sphi %s410, %s410
                  %s460 = sphi %s406, %s406
                $region114: #{get_uncertainty_forward.4} parent=103 // loop_header_branch
                  %457 = sbr.rel (%p455) target = $region118
                $region115: #{get_uncertainty_forward.4} parent=103 // loop_body
                  %v461 = vld [vmem:[%s459] sm:%s452]
                  %462 = vst [vmem:[%s460] sm:%s452] %v461
                  %v463 = vld [vmem:[%s459 + $0x8] sm:%s452]
                  %464 = vst [vmem:[%s460 + $0x4] sm:%s452] %v463
                  %v465 = vld [vmem:[%s459 + $0x10] sm:%s452]
                  %466 = vst [vmem:[%s460 + $0x8] sm:%s452] %v465
                  %v467 = vld [vmem:[%s459 + $0x18] sm:%s452]
                  %468 = vst [vmem:[%s460 + $0xc] sm:%s452] %v467
                  %v469 = vld [vmem:[%s459 + $0x20] sm:%s452]
                  %470 = vst [vmem:[%s460 + $0x10] sm:%s452] %v469
                  %v471 = vld [vmem:[%s459 + $0x28] sm:%s452]
                  %472 = vst [vmem:[%s460 + $0x14] sm:%s452] %v471
                  %v473 = vld [vmem:[%s459 + $0x30] sm:%s452]
                  %474 = vst [vmem:[%s460 + $0x18] sm:%s452] %v473
                $region116: #{get_uncertainty_forward.4} parent=103 // loop_footer
                  %s458 = sadd.s32 1, %s454
                $region117: #{get_uncertainty_forward.4} parent=103 // loop_footer_branch
                  %453 = sbr.rel target = $region113
                $region118: #{get_uncertainty_forward.4} parent=103 // loop_exit
                  _
              $region104: #{get_uncertainty_forward.4} parent=88 // pred_fallthru
                _
            $region89: #{get_uncertainty_forward.4} parent=84 // pred_fallthru
              _
            // Predicated region
            $region90: #{get_uncertainty_forward.4} parent=84 // pred_check
              _
            $region91: #{get_uncertainty_forward.4} parent=84 // pred_check_branch
              %416 = sbr.rel (0) target = $region93
            $region92: #{get_uncertainty_forward.4} parent=84 // pred_region
              %s418 = ssub.s32 16, 1
              loop: start=0, step=1, limit=1
              $region94: #{get_uncertainty_forward.4} parent=92 // loop_pre_header
                _
              $region95: #{get_uncertainty_forward.4} parent=92 // loop_header
                %s420 = sphi 0, %s424
                %p421 = scmp.ge.s32.totalorder %s420, 1
                %s425 = sphi %s410, %s410
                %s426 = sphi %s406, %s406
              $region96: #{get_uncertainty_forward.4} parent=92 // loop_header_branch
                %423 = sbr.rel (%p421) target = $region100
              $region97: #{get_uncertainty_forward.4} parent=92 // loop_body
                %v427 = vld [vmem:[%s425] sm:%s418]
                %428 = vst [vmem:[%s426] sm:%s418] %v427
                %v429 = vld [vmem:[%s425 + $0x8] sm:%s418]
                %430 = vst [vmem:[%s426 + $0x4] sm:%s418] %v429
                %v431 = vld [vmem:[%s425 + $0x10] sm:%s418]
                %432 = vst [vmem:[%s426 + $0x8] sm:%s418] %v431
                %v433 = vld [vmem:[%s425 + $0x18] sm:%s418]
                %434 = vst [vmem:[%s426 + $0xc] sm:%s418] %v433
                %v435 = vld [vmem:[%s425 + $0x20] sm:%s418]
                %436 = vst [vmem:[%s426 + $0x10] sm:%s418] %v435
                %v437 = vld [vmem:[%s425 + $0x28] sm:%s418]
                %438 = vst [vmem:[%s426 + $0x14] sm:%s418] %v437
                %v439 = vld [vmem:[%s425 + $0x30] sm:%s418]
                %440 = vst [vmem:[%s426 + $0x18] sm:%s418] %v439
              $region98: #{get_uncertainty_forward.4} parent=92 // loop_footer
                %s424 = sadd.s32 1, %s420
              $region99: #{get_uncertainty_forward.4} parent=92 // loop_footer_branch
                %419 = sbr.rel target = $region95
              $region100: #{get_uncertainty_forward.4} parent=92 // loop_exit
                _
            $region93: #{get_uncertainty_forward.4} parent=84 // pred_fallthru
              _
          $region85: #{get_uncertainty_forward.4} parent=80 // pred_fallthru
            _
          %475 = vnop
        $region81: #{get_uncertainty_forward.4} parent=35 // pred_fallthru
          _
        // Predicated region
        $region119: #{get_uncertainty_forward.4} parent=35 // pred_check
          %p476 = pneg %p107
        $region120: #{get_uncertainty_forward.4} parent=35 // pred_check_branch
          %478 = sbr.rel (%p476) target = $region122
        $region121: #{get_uncertainty_forward.4} parent=35 // pred_region
          %p479 = scmp.lt.s32.totalorder %s24, 1
          %s480 = scalar_select %p479, %s24, 1
          %p481 = scmp.lt.s32.totalorder %s25, 1
          %s482 = scalar_select %p481, %s25, 1
          %s483 = smul.addr %s480, 2
          %s484 = sadd.s32 %s482, %s483
          %s485 = scalar_lea.vmem %s2, %s484
        $region122: #{get_uncertainty_forward.4} parent=35 // pred_fallthru
          _
      $region36: #{get_uncertainty_forward.4} parent=5 // pred_fallthru
        _
      %p486 = scmp.le.s32.totalorder 1, %s17
      %p487 = scmp.lt.s32.totalorder %s17, 5
      %p488 = pnand %p486, %p487
      %p489 = pneg %p488
      // Predicated region
      $region123: #{get_uncertainty_forward.4} parent=5 // pred_check
        _
      $region124: #{get_uncertainty_forward.4} parent=5 // pred_check_branch
        %491 = sbr.rel (%p488) target = $region126
      $region125: #{get_uncertainty_forward.4} parent=5 // pred_region
        %s492 = ssub.s32 %s17, 1
        %s493 = sand.u32 %s44, 1
        %s494 = sand.u32 %s44, 1
        %s495 = smul.addr %s494, 16
        %s496 = scalar_lea.vmem [#allocation2], %s495
        // Predicated region
        $region127: #{get_uncertainty_forward.4} parent=125 // pred_check
          %p497 = pneg %p57
        $region128: #{get_uncertainty_forward.4} parent=125 // pred_check_branch
          %499 = sbr.rel (%p497) target = $region130
        $region129: #{get_uncertainty_forward.4} parent=125 // pred_region
          _
        $region130: #{get_uncertainty_forward.4} parent=125 // pred_fallthru
          _
        %s500 = sand.u32 %s72, 1
        %s501 = sand.u32 %s72, 1
        %s502 = smul.addr %s501, 28
        %s503 = scalar_lea.vmem [#allocation3], %s502
        // Predicated region
        $region131: #{get_uncertainty_forward.4} parent=125 // pred_check
          %p504 = pneg %p85
        $region132: #{get_uncertainty_forward.4} parent=125 // pred_check_branch
          %506 = sbr.rel (%p504) target = $region134
        $region133: #{get_uncertainty_forward.4} parent=125 // pred_region
          _
        $region134: #{get_uncertainty_forward.4} parent=125 // pred_fallthru
          _
        %s507 = sand.u32 %s44, 1
        %s508 = sand.u32 %s44, 1
        %s509 = smul.addr %s508, 16
        %s510 = scalar_lea.vmem [#allocation2], %s509
        %p511 = pneg %p57
        %p512 = pneg %p54
        %s513 = sand.u32 %s72, 1
        %s514 = sand.u32 %s72, 1
        %s515 = smul.addr %s514, 28
        %s516 = scalar_lea.vmem [#allocation3], %s515
        %p517 = pneg %p85
        %p518 = pneg %p82
        %p519 = scmp.lt.s32.totalorder %s26, 1
        %s520 = scalar_select %p519, %s26, 1
        %p521 = scmp.lt.s32.totalorder %s27, 1
        %s522 = scalar_select %p521, %s27, 1
        %s523 = smul.addr %s520, 2
        %s524 = sadd.s32 %s522, %s523
        %s525 = scalar_lea.vmem %s2, %s524
        %p526 = pneg %p113
        %p527 = pneg %p110
        %p528 = pneg %p134
        %p529 = pneg %p131
        %p530 = pneg %p155
        %p531 = pneg %p152
        %p532 = pneg %p176
        %p533 = pneg %p173
        %p534 = pneg %p197
        %p535 = pneg %p194
        %p536 = pneg %p218
        %p537 = pneg %p215
        %p538 = pneg %p246
        %p539 = pneg %p243
        %s540 = sand.u32 %s233, 1
        %s541 = sand.u32 %s233, 1
        %s542 = smul.addr %s541, 16
        %s543 = scalar_lea.vmem [#allocation4], %s542
        %p544 = pneg %p274
        %p545 = pneg %p271
        %p546 = scmp.lt.s32.totalorder %s26, 1
        %s547 = scalar_select %p546, %s26, 1
        %p548 = scmp.lt.s32.totalorder %s27, 1
        %s549 = scalar_select %p548, %s27, 1
        %s550 = smul.addr %s547, 2
        %s551 = sadd.s32 %s549, %s550
        %s552 = scalar_lea.vmem %s9, %s551
        %p553 = pneg %p302
        %p554 = pneg %p299
        %p555 = scmp.lt.s32.totalorder %s26, 1
        %s556 = scalar_select %p555, %s26, 1
        %p557 = scmp.lt.s32.totalorder %s27, 1
        %s558 = scalar_select %p557, %s27, 1
        %s559 = smul.addr %s556, 2
        %s560 = sadd.s32 %s558, %s559
        %s561 = scalar_lea.vmem %s10, %s560
        %p562 = scmp.lt.s32.totalorder %s26, 1
        %s563 = scalar_select %p562, %s26, 1
        %p564 = scmp.lt.s32.totalorder %s27, 1
        %s565 = scalar_select %p564, %s27, 1
        %s566 = smul.addr %s563, 2
        %s567 = sadd.s32 %s565, %s566
        %s568 = scalar_lea.vmem %s2, %s567
        %p569 = scmp.lt.s32.totalorder %s26, 1
        %s570 = scalar_select %p569, %s26, 1
        %p571 = scmp.lt.s32.totalorder %s27, 1
        %s572 = scalar_select %p571, %s27, 1
        %s573 = smul.addr %s570, 2
        %s574 = sadd.s32 %s572, %s573
        %s575 = scalar_lea.vmem %s9, %s574
        %p576 = scmp.lt.s32.totalorder %s26, 1
        %s577 = scalar_select %p576, %s26, 1
        %p578 = scmp.lt.s32.totalorder %s27, 1
        %s579 = scalar_select %p578, %s27, 1
        %s580 = smul.addr %s577, 2
        %s581 = sadd.s32 %s579, %s580
        %s582 = scalar_lea.vmem %s10, %s581
        %v584 = vld [vmem:[%s3] sm:$0xf]
        %v585 = vld [vmem:[%s3 + $0x4] sm:$0xf]
        %v586 = vld [vmem:[%s3 + $0x8] sm:$0xf]
        %v587 = vld [vmem:[%s3 + $0xc] sm:$0xf]
        %v588 = vld [vmem:[%s496] sm:$0xf]
        %v589 = vld [vmem:[%s496 + $0x4] sm:$0xf]
        %v590 = vld [vmem:[%s496 + $0x8] sm:$0xf]
        %v591 = vld [vmem:[%s496 + $0xc] sm:$0xf]
        %v596 = vunpack.c.l.b16 %v584
        %v597 = vunpack.c.l.b16 %v585
        %v598 = vunpack.c.l.b16 %v586
        %v599 = vunpack.c.l.b16 %v587
        %v600 = vpack.c.b16 %v597, %v596
        %v601 = vpack.c.b16 %v599, %v598
        %v606 = vunpack.c.l.b16 %v588
        %v607 = vunpack.c.l.b16 %v589
        %v608 = vunpack.c.l.b16 %v590
        %v609 = vunpack.c.l.b16 %v591
        %v610 = vpack.c.b16 %v607, %v606
        %v611 = vpack.c.b16 %v609, %v608
        %vm614 = vcmask 261120
        %v616 = vsel %vm614, %v600, 0
        %v619 = vsel %vm614, %v601, 0
        %621 = vmatprep.subr.bf16.mxu0 0
        %622 = vmatpush1.bf16.msra.mxu0 0
        %623 = vmatprep.subr.bf16.mxu0 0
        %624 = vmatpush1.bf16.msra.mxu0 0
        %625 = vmatprep.subr.bf16.mxu0 0
        %626 = vmatpush1.bf16.msra.mxu0 0
        %627 = vmatprep.subr.bf16.mxu0 0
        %628 = vmatpush1.bf16.msra.mxu0 0
        %629 = vmatprep.subr.bf16.mxu0 0
        %630 = vmatpush1.bf16.msra.mxu0 0
        %631 = vmatprep.subr.bf16.mxu0 0
        %632 = vmatpush1.bf16.msra.mxu0 0
        %633 = vmatprep.subr.bf16.mxu0 0
        %634 = vmatpush1.bf16.msra.mxu0 %v611
        %635 = vmatprep.subr.bf16.mxu0 0
        %636 = vmatpush1.bf16.msra.mxu0 %v610
        %637 = vmatprep.subr.bf16.mxu0 0
        %638 = vmatpush2.bf16.msra.mxu0 0
        %639 = vmatprep.subr.bf16.mxu0 0
        %640 = vmatpush2.bf16.msra.mxu0 0
        %641 = vmatprep.subr.bf16.mxu0 0
        %642 = vmatpush2.bf16.msra.mxu0 0
        %643 = vmatprep.subr.bf16.mxu0 0
        %644 = vmatpush2.bf16.msra.mxu0 0
        %645 = vmatprep.subr.bf16.mxu0 0
        %646 = vmatpush2.bf16.msra.mxu0 0
        %647 = vmatprep.subr.bf16.mxu0 0
        %648 = vmatpush2.bf16.msra.mxu0 0
        %649 = vmatprep.subr.bf16.mxu0 0
        %650 = vmatpush2.bf16.msra.mxu0 0
        %651 = vmatprep.subr.bf16.mxu0 0
        %652 = vmatpush2.bf16.msra.mxu0 0
        %653 = vmatprep.mubr.bf16.mxu0 0
        %654 = vmatmul.mubr.bf16.gmra.mxu0 %v616
        %v655 = vpop.f32.mrf.mxu0
        %v656 = vadd.f32 0.0, %v655
        %v657 = vpop.f32.mrf.mxu0
        %v658 = vpop.f32.mrf.mxu0
        %v659 = vadd.f32 0.0, %v658
        %v660 = vpop.f32.mrf.mxu0
        %661 = vmatprep.mubr.bf16.mxu0 0
        %662 = vmatmul.mubr.bf16.gmra.mxu0 %v619
        %v663 = vpop.f32.mrf.mxu0
        %v664 = vadd.f32 0.0, %v663
        %v665 = vpop.f32.mrf.mxu0
        %v666 = vpop.f32.mrf.mxu0
        %v667 = vadd.f32 0.0, %v666
        %v668 = vpop.f32.mrf.mxu0
        %669 = vdwg.mxu0
        %v670 = vld [vmem:[%s4] sm:$0xff]
        %v671 = vld [vmem:[%s4 + $0x8] sm:$0xff]
        %v672 = vld [vmem:[%s4 + $0x10] sm:$0xff]
        %v673 = vld [vmem:[%s4 + $0x18] sm:$0xff]
        %675 = vset.pattern.permute.xlu0 0
        %676 = vperm.xlu0 %675, %v670
        %v677 = vpop.permute.xlu0 %676
        %680 = vset.pattern.permute.xlu0 0
        %681 = vperm.xlu0 %680, %v671
        %v682 = vpop.permute.xlu0 %681
        %685 = vset.pattern.permute.xlu0 0
        %686 = vperm.xlu0 %685, %v672
        %v687 = vpop.permute.xlu0 %686
        %690 = vset.pattern.permute.xlu0 0
        %691 = vperm.xlu0 %690, %v673
        %v692 = vpop.permute.xlu0 %691
        %v694 = vmul.f32 %v656, %v677
        %v695 = vmul.f32 %v659, %v682
        %v696 = vmul.f32 %v664, %v687
        %v697 = vmul.f32 %v667, %v692
        %v698 = vld [vmem:[%s5] sm:$0xff]
        %v699 = vld [vmem:[%s5 + $0x8] sm:$0xff]
        %v700 = vld [vmem:[%s5 + $0x10] sm:$0xff]
        %v701 = vld [vmem:[%s5 + $0x18] sm:$0xff]
        %703 = vset.pattern.permute.xlu0 0
        %704 = vperm.xlu0 %703, %v698
        %v705 = vpop.permute.xlu0 %704
        %708 = vset.pattern.permute.xlu0 0
        %709 = vperm.xlu0 %708, %v699
        %v710 = vpop.permute.xlu0 %709
        %713 = vset.pattern.permute.xlu0 0
        %714 = vperm.xlu0 %713, %v700
        %v715 = vpop.permute.xlu0 %714
        %718 = vset.pattern.permute.xlu0 0
        %719 = vperm.xlu0 %718, %v701
        %v720 = vpop.permute.xlu0 %719
        %v722 = vadd.f32 %v694, %v705
        %v723 = vadd.f32 %v695, %v710
        %v724 = vadd.f32 %v696, %v715
        %v725 = vadd.f32 %v697, %v720
        %v726 = vmax.f32 %v722, 0.0
        %v727 = vmax.f32 %v723, 0.0
        %v728 = vmax.f32 %v724, 0.0
        %v729 = vmax.f32 %v725, 0.0
        %v730 = vld [vmem:[%s6] sm:$0xf]
        %v731 = vld [vmem:[%s6 + $0x4] sm:$0xf]
        %v732 = vld [vmem:[%s6 + $0x8] sm:$0xf]
        %v733 = vld [vmem:[%s6 + $0xc] sm:$0xf]
        %v734 = vld [vmem:[%s6 + $0x10] sm:$0xf]
        %v735 = vld [vmem:[%s6 + $0x14] sm:$0xf]
        %v736 = vpack.c.bf16 %v727, %v726
        %v737 = vpack.c.bf16 %v729, %v728
        %v738 = vld [vmem:[%s7] sm:$0xff]
        %v739 = vld [vmem:[%s7 + $0x8] sm:$0xff]
        %v740 = vld [vmem:[%s7 + $0x10] sm:$0xff]
        %v741 = vld [vmem:[%s7 + $0x18] sm:$0xff]
        %v742 = vld [vmem:[%s7 + $0x20] sm:$0xff]
        %v743 = vld [vmem:[%s7 + $0x28] sm:$0xff]
        %745 = vset.pattern.permute.xlu0 0
        %746 = vperm.xlu0 %745, %v738
        %v747 = vpop.permute.xlu0 %746
        %750 = vset.pattern.permute.xlu0 0
        %751 = vperm.xlu0 %750, %v739
        %v752 = vpop.permute.xlu0 %751
        %755 = vset.pattern.permute.xlu0 0
        %756 = vperm.xlu0 %755, %v740
        %v757 = vpop.permute.xlu0 %756
        %760 = vset.pattern.permute.xlu0 0
        %761 = vperm.xlu0 %760, %v741
        %v762 = vpop.permute.xlu0 %761
        %765 = vset.pattern.permute.xlu0 0
        %766 = vperm.xlu0 %765, %v742
        %v767 = vpop.permute.xlu0 %766
        %770 = vset.pattern.permute.xlu0 0
        %771 = vperm.xlu0 %770, %v743
        %v772 = vpop.permute.xlu0 %771
        %v780 = vunpack.c.l.b16 %v730
        %v781 = vunpack.c.l.b16 %v731
        %v782 = vunpack.c.l.b16 %v732
        %v783 = vunpack.c.l.b16 %v733
        %v784 = vunpack.c.l.b16 %v734
        %v785 = vunpack.c.l.b16 %v735
        %v786 = vpack.c.b16 %v781, %v780
        %v787 = vpack.c.b16 %v783, %v782
        %v788 = vpack.c.b16 %v785, %v784
        %v790 = vsel %vm614, %v786, 0
        %v793 = vsel %vm614, %v787, 0
        %v796 = vsel %vm614, %v788, 0
        %798 = vmatprep.subr.bf16.mxu0 0
        %799 = vmatpush1.bf16.msra.mxu0 0
        %800 = vmatprep.subr.bf16.mxu0 0
        %801 = vmatpush1.bf16.msra.mxu0 0
        %802 = vmatprep.subr.bf16.mxu0 0
        %803 = vmatpush1.bf16.msra.mxu0 0
        %804 = vmatprep.subr.bf16.mxu0 0
        %805 = vmatpush1.bf16.msra.mxu0 0
        %806 = vmatprep.subr.bf16.mxu0 0
        %807 = vmatpush1.bf16.msra.mxu0 0
        %808 = vmatprep.subr.bf16.mxu0 0
        %809 = vmatpush1.bf16.msra.mxu0 0
        %810 = vmatprep.subr.bf16.mxu0 0
        %811 = vmatpush1.bf16.msra.mxu0 %v737
        %812 = vmatprep.subr.bf16.mxu0 0
        %813 = vmatpush1.bf16.msra.mxu0 %v736
        %814 = vmatprep.subr.bf16.mxu0 0
        %815 = vmatpush2.bf16.msra.mxu0 0
        %816 = vmatprep.subr.bf16.mxu0 0
        %817 = vmatpush2.bf16.msra.mxu0 0
        %818 = vmatprep.subr.bf16.mxu0 0
        %819 = vmatpush2.bf16.msra.mxu0 0
        %820 = vmatprep.subr.bf16.mxu0 0
        %821 = vmatpush2.bf16.msra.mxu0 0
        %822 = vmatprep.subr.bf16.mxu0 0
        %823 = vmatpush2.bf16.msra.mxu0 0
        %824 = vmatprep.subr.bf16.mxu0 0
        %825 = vmatpush2.bf16.msra.mxu0 0
        %826 = vmatprep.subr.bf16.mxu0 0
        %827 = vmatpush2.bf16.msra.mxu0 0
        %828 = vmatprep.subr.bf16.mxu0 0
        %829 = vmatpush2.bf16.msra.mxu0 0
        %830 = vmatprep.mubr.bf16.mxu0 0
        %831 = vmatmul.mubr.bf16.gmra.mxu0 %v790
        %v832 = vpop.f32.mrf.mxu0
        %v833 = vadd.f32 %v747, %v832
        %v834 = vpop.f32.mrf.mxu0
        %v835 = vpop.f32.mrf.mxu0
        %v836 = vadd.f32 %v752, %v835
        %v837 = vpop.f32.mrf.mxu0
        %838 = vmatprep.mubr.bf16.mxu0 0
        %839 = vmatmul.mubr.bf16.gmra.mxu0 %v793
        %v840 = vpop.f32.mrf.mxu0
        %v841 = vadd.f32 %v757, %v840
        %v842 = vpop.f32.mrf.mxu0
        %v843 = vpop.f32.mrf.mxu0
        %v844 = vadd.f32 %v762, %v843
        %v845 = vpop.f32.mrf.mxu0
        %846 = vmatprep.mubr.bf16.mxu0 0
        %847 = vmatmul.mubr.bf16.gmra.mxu0 %v796
        %v848 = vpop.f32.mrf.mxu0
        %v849 = vadd.f32 %v767, %v848
        %v850 = vpop.f32.mrf.mxu0
        %v851 = vpop.f32.mrf.mxu0
        %v852 = vadd.f32 %v772, %v851
        %v853 = vpop.f32.mrf.mxu0
        %854 = vdwg.mxu0
        %v855 = vpack.c.bf16 %v836, %v833
        %v856 = vpack.c.bf16 %v844, %v841
        %v859 = vunpack.c.l.b16 %v855
        %v860 = vunpack.c.h.b16 %v855
        %v861 = vunpack.c.l.b16 %v856
        %v862 = vunpack.c.h.b16 %v856
        %v863 = vpack.c.b16 %v859, %v859
        %v864 = vpack.c.b16 %v860, %v860
        %v865 = vpack.c.b16 %v861, %v861
        %v866 = vpack.c.b16 %v862, %v862
        %871 = vst [vmem:[%s543] sm:$0xf] %v863
        %872 = vst [vmem:[%s543 + $0x4] sm:$0xf] %v864
        %873 = vst [vmem:[%s543 + $0x8] sm:$0xf] %v865
        %874 = vst [vmem:[%s543 + $0xc] sm:$0xf] %v866
        %v875 = vmul.f32 %v852, 0.5
        %v876 = vmul.f32 %v875, 1.442695
        %v877 = vpow.pop %v876
        %v878 = vld [vmem:[%s568] sm:$0x1]
        %v879 = vmul.f32 %v878, %v877
        %v880 = vadd.f32 %v879, %v849
        %881 = vst [vmem:[%s575] sm:$0x1] %v880
        %v882 = vmul.f32 %v877, 0.5
        %v883 = vmul.f32 %v849, 0.5
        %v884 = vld [vmem:[%s503] sm:$0xf]
        %v885 = vunpack.c.l.bf16 %v884
        %v886 = vlaneseq
        %v887 = vshrl.u32 %v886, 7
        %v888 = vsub.s32 0, %v887
        %v889 = vrot.slane %v882, %v888
        %v890 = vmul.f32 %v885, %v889
        %v891 = vlaneseq
        %v892 = vshrl.u32 %v891, 7
        %v893 = vsub.s32 0, %v892
        %v894 = vrot.slane %v883, %v893
        %v895 = vadd.f32 %v890, %v894
        %v896 = vtanh.pop %v895
        %v897 = vrot.slane %v896, 4
        %v898 = vadd.f32 %v896, %v897
        %v899 = vrot.slane %v898, 2
        %v900 = vadd.f32 %v898, %v899
        %v901 = vrot.slane %v900, 1
        %v902 = vadd.f32 %v900, %v901
        %v903 = vmul.f32 %v896, %v896
        %v904 = vrot.slane %v903, 4
        %v905 = vadd.f32 %v903, %v904
        %v906 = vrot.slane %v905, 2
        %v907 = vadd.f32 %v905, %v906
        %v908 = vrot.slane %v907, 1
        %v909 = vadd.f32 %v907, %v908
        %v910 = vadd.f32 %v902, 0.0
        %v911 = vadd.f32 %v909, 0.0
        %s912 = scalar_lea.vmem %s503, 4 [#allocation3]
        %v913 = vld [vmem:[%s912] sm:$0xf]
        %v914 = vunpack.c.l.bf16 %v913
        %v915 = vmul.f32 %v914, %v889
        %v916 = vadd.f32 %v915, %v894
        %v917 = vtanh.pop %v916
        %v918 = vrot.slane %v917, 4
        %v919 = vadd.f32 %v917, %v918
        %v920 = vrot.slane %v919, 2
        %v921 = vadd.f32 %v919, %v920
        %v922 = vrot.slane %v921, 1
        %v923 = vadd.f32 %v921, %v922
        %v924 = vmul.f32 %v917, %v917
        %v925 = vrot.slane %v924, 4
        %v926 = vadd.f32 %v924, %v925
        %v927 = vrot.slane %v926, 2
        %v928 = vadd.f32 %v926, %v927
        %v929 = vrot.slane %v928, 1
        %v930 = vadd.f32 %v928, %v929
        %v931 = vadd.f32 %v910, %v923
        %v932 = vadd.f32 %v911, %v930
        %s933 = scalar_lea.vmem %s503, 8 [#allocation3]
        %v934 = vld [vmem:[%s933] sm:$0xf]
        %v935 = vunpack.c.l.bf16 %v934
        %v936 = vmul.f32 %v935, %v889
        %v937 = vadd.f32 %v936, %v894
        %v938 = vtanh.pop %v937
        %v939 = vrot.slane %v938, 4
        %v940 = vadd.f32 %v938, %v939
        %v941 = vrot.slane %v940, 2
        %v942 = vadd.f32 %v940, %v941
        %v943 = vrot.slane %v942, 1
        %v944 = vadd.f32 %v942, %v943
        %v945 = vmul.f32 %v938, %v938
        %v946 = vrot.slane %v945, 4
        %v947 = vadd.f32 %v945, %v946
        %v948 = vrot.slane %v947, 2
        %v949 = vadd.f32 %v947, %v948
        %v950 = vrot.slane %v949, 1
        %v951 = vadd.f32 %v949, %v950
        %v952 = vadd.f32 %v931, %v944
        %v953 = vadd.f32 %v932, %v951
        %s954 = scalar_lea.vmem %s503, 12 [#allocation3]
        %v955 = vld [vmem:[%s954] sm:$0xf]
        %v956 = vunpack.c.l.bf16 %v955
        %v957 = vmul.f32 %v956, %v889
        %v958 = vadd.f32 %v957, %v894
        %v959 = vtanh.pop %v958
        %v960 = vrot.slane %v959, 4
        %v961 = vadd.f32 %v959, %v960
        %v962 = vrot.slane %v961, 2
        %v963 = vadd.f32 %v961, %v962
        %v964 = vrot.slane %v963, 1
        %v965 = vadd.f32 %v963, %v964
        %v966 = vmul.f32 %v959, %v959
        %v967 = vrot.slane %v966, 4
        %v968 = vadd.f32 %v966, %v967
        %v969 = vrot.slane %v968, 2
        %v970 = vadd.f32 %v968, %v969
        %v971 = vrot.slane %v970, 1
        %v972 = vadd.f32 %v970, %v971
        %v973 = vadd.f32 %v952, %v965
        %v974 = vadd.f32 %v953, %v972
        %s975 = scalar_lea.vmem %s503, 16 [#allocation3]
        %v976 = vld [vmem:[%s975] sm:$0xf]
        %v977 = vunpack.c.l.bf16 %v976
        %v978 = vmul.f32 %v977, %v889
        %v979 = vadd.f32 %v978, %v894
        %v980 = vtanh.pop %v979
        %v981 = vrot.slane %v980, 4
        %v982 = vadd.f32 %v980, %v981
        %v983 = vrot.slane %v982, 2
        %v984 = vadd.f32 %v982, %v983
        %v985 = vrot.slane %v984, 1
        %v986 = vadd.f32 %v984, %v985
        %v987 = vmul.f32 %v980, %v980
        %v988 = vrot.slane %v987, 4
        %v989 = vadd.f32 %v987, %v988
        %v990 = vrot.slane %v989, 2
        %v991 = vadd.f32 %v989, %v990
        %v992 = vrot.slane %v991, 1
        %v993 = vadd.f32 %v991, %v992
        %v994 = vadd.f32 %v973, %v986
        %v995 = vadd.f32 %v974, %v993
        %s996 = scalar_lea.vmem %s503, 20 [#allocation3]
        %v997 = vld [vmem:[%s996] sm:$0xf]
        %v998 = vunpack.c.l.bf16 %v997
        %v999 = vmul.f32 %v998, %v889
        %v1000 = vadd.f32 %v999, %v894
        %v1001 = vtanh.pop %v1000
        %v1002 = vrot.slane %v1001, 4
        %v1003 = vadd.f32 %v1001, %v1002
        %v1004 = vrot.slane %v1003, 2
        %v1005 = vadd.f32 %v1003, %v1004
        %v1006 = vrot.slane %v1005, 1
        %v1007 = vadd.f32 %v1005, %v1006
        %v1008 = vmul.f32 %v1001, %v1001
        %v1009 = vrot.slane %v1008, 4
        %v1010 = vadd.f32 %v1008, %v1009
        %v1011 = vrot.slane %v1010, 2
        %v1012 = vadd.f32 %v1010, %v1011
        %v1013 = vrot.slane %v1012, 1
        %v1014 = vadd.f32 %v1012, %v1013
        %v1015 = vadd.f32 %v994, %v1007
        %v1016 = vadd.f32 %v995, %v1014
        %v1017 = vld [vmem:[%s503 + $0x18] sm:$0x1]
        %v1018 = vunpack.c.l.bf16 %v1017
        %v1019 = vmul.f32 %v1018, %v889
        %v1020 = vadd.f32 %v1019, %v894
        %v1021 = vtanh.pop %v1020
        %vm1022 = vcmask 1041408
        %v1023 = vsel %vm1022, %v1021, 0.0
        %v1024 = vrot.slane %v1023, 4
        %v1025 = vadd.f32 %v1023, %v1024
        %v1026 = vrot.slane %v1025, 2
        %v1027 = vadd.f32 %v1025, %v1026
        %v1028 = vrot.slane %v1027, 1
        %v1029 = vadd.f32 %v1027, %v1028
        %v1030 = vmul.f32 %v1021, %v1021
        %v1031 = vsel %vm1022, %v1030, 0.0
        %v1032 = vrot.slane %v1031, 4
        %v1033 = vadd.f32 %v1031, %v1032
        %v1034 = vrot.slane %v1033, 2
        %v1035 = vadd.f32 %v1033, %v1034
        %v1036 = vrot.slane %v1035, 1
        %v1037 = vadd.f32 %v1035, %v1036
        %v1038 = vadd.f32 %v1015, %v1029
        %v1039 = vadd.f32 %v1016, %v1037
        %v1040 = vmul.f32 %v1038, %v1038
        %v1041 = vmul.f32 %v1040, 0.02
        %v1042 = vsub.f32 %v1039, %v1041
        %v1043 = vmul.f32 %v1042, 0.020408163
        %v1044 = vmul.f32 %v1043, 0.25
        %v1045 = vmax.f32 %v1044, 0.0
        %1046 = vst [vmem:[%s582] sm:$0x1] %v1045
        %s1047 = sand.u32 %s233, 1
        %s1048 = sand.u32 %s233, 1
        %s1049 = smul.addr %s1048, 16
        %s1050 = scalar_lea.vmem [#allocation4], %s1049
        %p1051 = scmp.lt.s32.totalorder %s26, 1
        %s1052 = scalar_select %p1051, %s26, 1
        %p1053 = scmp.lt.s32.totalorder %s27, 1
        %s1054 = scalar_select %p1053, %s27, 1
        %s1055 = smul.addr %s1052, 2
        %s1056 = sadd.s32 %s1054, %s1055
        %s1057 = scalar_lea.vmem %s9, %s1056
        %p1058 = scmp.lt.s32.totalorder %s26, 1
        %s1059 = scalar_select %p1058, %s26, 1
        %p1060 = scmp.lt.s32.totalorder %s27, 1
        %s1061 = scalar_select %p1060, %s27, 1
        %s1062 = smul.addr %s1059, 2
        %s1063 = sadd.s32 %s1061, %s1062
        %s1064 = scalar_lea.vmem %s10, %s1063
        // Predicated region
        $region135: #{get_uncertainty_forward.4} parent=125 // pred_check
          %p1065 = pneg %p243
        $region136: #{get_uncertainty_forward.4} parent=125 // pred_check_branch
          %1067 = sbr.rel (%p1065) target = $region138
        $region137: #{get_uncertainty_forward.4} parent=125 // pred_region
          %s1068 = smul.addr %s26, 8
          %s1069 = sadd.s32 %s27, %s1068
          %s1070 = smul.addr %s1069, 4
          %s1071 = scalar_lea.vmem %s8, %s1070
          // Predicated region
          $region139: #{get_uncertainty_forward.4} parent=137 // pred_check
            _
          $region140: #{get_uncertainty_forward.4} parent=137 // pred_check_branch
            %1073 = sbr.rel (0) target = $region142
          $region141: #{get_uncertainty_forward.4} parent=137 // pred_region
            // Predicated region
            $region143: #{get_uncertainty_forward.4} parent=141 // pred_check
              _
            $region144: #{get_uncertainty_forward.4} parent=141 // pred_check_branch
              %1075 = sbr.rel target = $region146
            $region145: #{get_uncertainty_forward.4} parent=141 // pred_region
              // Predicated region
              $region158: #{get_uncertainty_forward.4} parent=145 // pred_check
                _
              $region159: #{get_uncertainty_forward.4} parent=145 // pred_check_branch
                %1097 = sbr.rel (0) target = $region161
              $region160: #{get_uncertainty_forward.4} parent=145 // pred_region
                loop: start=0, step=1, limit=1
                $region162: #{get_uncertainty_forward.4} parent=160 // loop_pre_header
                  _
                $region163: #{get_uncertainty_forward.4} parent=160 // loop_header
                  %s1099 = sphi 0, %s1103
                  %p1100 = scmp.ge.s32.totalorder %s1099, 1
                  %s1104 = sphi %s1050, %s1050
                  %s1105 = sphi %s1071, %s1071
                $region164: #{get_uncertainty_forward.4} parent=160 // loop_header_branch
                  %1102 = sbr.rel (%p1100) target = $region168
                $region165: #{get_uncertainty_forward.4} parent=160 // loop_body
                  _
                $region166: #{get_uncertainty_forward.4} parent=160 // loop_footer
                  %s1103 = sadd.s32 1, %s1099
                $region167: #{get_uncertainty_forward.4} parent=160 // loop_footer_branch
                  %1098 = sbr.rel target = $region163
                $region168: #{get_uncertainty_forward.4} parent=160 // loop_exit
                  _
                %s1107 = ssub.s32 16, 1
                loop: start=0, step=1, limit=1
                $region169: #{get_uncertainty_forward.4} parent=160 // loop_pre_header
                  _
                $region170: #{get_uncertainty_forward.4} parent=160 // loop_header
                  %s1109 = sphi 0, %s1113
                  %p1110 = scmp.ge.s32.totalorder %s1109, 1
                  %s1114 = sphi %s1050, %s1050
                  %s1115 = sphi %s1071, %s1071
                $region171: #{get_uncertainty_forward.4} parent=160 // loop_header_branch
                  %1112 = sbr.rel (%p1110) target = $region175
                $region172: #{get_uncertainty_forward.4} parent=160 // loop_body
                  %v1116 = vld [vmem:[%s1114] sm:%s1107]
                  %1117 = vst [vmem:[%s1115] sm:%s1107] %v1116
                  %v1118 = vld [vmem:[%s1114 + $0x4] sm:%s1107]
                  %1119 = vst [vmem:[%s1115 + $0x8] sm:%s1107] %v1118
                  %v1120 = vld [vmem:[%s1114 + $0x8] sm:%s1107]
                  %1121 = vst [vmem:[%s1115 + $0x10] sm:%s1107] %v1120
                  %v1122 = vld [vmem:[%s1114 + $0xc] sm:%s1107]
                  %1123 = vst [vmem:[%s1115 + $0x18] sm:%s1107] %v1122
                $region173: #{get_uncertainty_forward.4} parent=160 // loop_footer
                  %s1113 = sadd.s32 1, %s1109
                $region174: #{get_uncertainty_forward.4} parent=160 // loop_footer_branch
                  %1108 = sbr.rel target = $region170
                $region175: #{get_uncertainty_forward.4} parent=160 // loop_exit
                  _
              $region161: #{get_uncertainty_forward.4} parent=145 // pred_fallthru
                _
            $region146: #{get_uncertainty_forward.4} parent=141 // pred_fallthru
              _
            // Predicated region
            $region147: #{get_uncertainty_forward.4} parent=141 // pred_check
              _
            $region148: #{get_uncertainty_forward.4} parent=141 // pred_check_branch
              %1077 = sbr.rel (0) target = $region150
            $region149: #{get_uncertainty_forward.4} parent=141 // pred_region
              %s1079 = ssub.s32 16, 1
              loop: start=0, step=1, limit=1
              $region151: #{get_uncertainty_forward.4} parent=149 // loop_pre_header
                _
              $region152: #{get_uncertainty_forward.4} parent=149 // loop_header
                %s1081 = sphi 0, %s1085
                %p1082 = scmp.ge.s32.totalorder %s1081, 1
                %s1086 = sphi %s1050, %s1050
                %s1087 = sphi %s1071, %s1071
              $region153: #{get_uncertainty_forward.4} parent=149 // loop_header_branch
                %1084 = sbr.rel (%p1082) target = $region157
              $region154: #{get_uncertainty_forward.4} parent=149 // loop_body
                %v1088 = vld [vmem:[%s1086] sm:%s1079]
                %1089 = vst [vmem:[%s1087] sm:%s1079] %v1088
                %v1090 = vld [vmem:[%s1086 + $0x4] sm:%s1079]
                %1091 = vst [vmem:[%s1087 + $0x8] sm:%s1079] %v1090
                %v1092 = vld [vmem:[%s1086 + $0x8] sm:%s1079]
                %1093 = vst [vmem:[%s1087 + $0x10] sm:%s1079] %v1092
                %v1094 = vld [vmem:[%s1086 + $0xc] sm:%s1079]
                %1095 = vst [vmem:[%s1087 + $0x18] sm:%s1079] %v1094
              $region155: #{get_uncertainty_forward.4} parent=149 // loop_footer
                %s1085 = sadd.s32 1, %s1081
              $region156: #{get_uncertainty_forward.4} parent=149 // loop_footer_branch
                %1080 = sbr.rel target = $region152
              $region157: #{get_uncertainty_forward.4} parent=149 // loop_exit
                _
            $region150: #{get_uncertainty_forward.4} parent=141 // pred_fallthru
              _
          $region142: #{get_uncertainty_forward.4} parent=137 // pred_fallthru
            _
          %1124 = vnop
        $region138: #{get_uncertainty_forward.4} parent=125 // pred_fallthru
          _
        // Predicated region
        $region176: #{get_uncertainty_forward.4} parent=125 // pred_check
          %p1125 = pneg %p271
        $region177: #{get_uncertainty_forward.4} parent=125 // pred_check_branch
          %1127 = sbr.rel (%p1125) target = $region179
        $region178: #{get_uncertainty_forward.4} parent=125 // pred_region
          _
        $region179: #{get_uncertainty_forward.4} parent=125 // pred_fallthru
          _
        // Predicated region
        $region180: #{get_uncertainty_forward.4} parent=125 // pred_check
          %p1128 = pneg %p299
        $region181: #{get_uncertainty_forward.4} parent=125 // pred_check_branch
          %1130 = sbr.rel (%p1128) target = $region183
        $region182: #{get_uncertainty_forward.4} parent=125 // pred_region
          _
        $region183: #{get_uncertainty_forward.4} parent=125 // pred_fallthru
          _
      $region126: #{get_uncertainty_forward.4} parent=5 // pred_fallthru
        _
      %p1131 = scmp.le.s32.totalorder 2, %s17
      // Predicated region
      $region184: #{get_uncertainty_forward.4} parent=5 // pred_check
        %p1132 = pneg %p1131
      $region185: #{get_uncertainty_forward.4} parent=5 // pred_check_branch
        %1134 = sbr.rel (%p1132) target = $region187
      $region186: #{get_uncertainty_forward.4} parent=5 // pred_region
        %s1135 = ssub.s32 %s17, 2
        // Predicated region
        $region188: #{get_uncertainty_forward.4} parent=186 // pred_check
          %p1136 = pneg %p249
        $region189: #{get_uncertainty_forward.4} parent=186 // pred_check_branch
          %1138 = sbr.rel (%p1136) target = $region191
        $region190: #{get_uncertainty_forward.4} parent=186 // pred_region
          %s1139 = sand.u32 %s234, 1
          %s1140 = sand.u32 %s234, 1
          %s1141 = smul.addr %s1140, 16
          %s1142 = scalar_lea.vmem [#allocation4], %s1141
        $region191: #{get_uncertainty_forward.4} parent=186 // pred_fallthru
          _
        // Predicated region
        $region192: #{get_uncertainty_forward.4} parent=186 // pred_check
          %p1143 = pneg %p277
        $region193: #{get_uncertainty_forward.4} parent=186 // pred_check_branch
          %1145 = sbr.rel (%p1143) target = $region195
        $region194: #{get_uncertainty_forward.4} parent=186 // pred_region
          %p1146 = scmp.lt.s32.totalorder %s28, 1
          %s1147 = scalar_select %p1146, %s28, 1
          %p1148 = scmp.lt.s32.totalorder %s29, 1
          %s1149 = scalar_select %p1148, %s29, 1
          %s1150 = smul.addr %s1147, 2
          %s1151 = sadd.s32 %s1149, %s1150
          %s1152 = scalar_lea.vmem %s9, %s1151
        $region195: #{get_uncertainty_forward.4} parent=186 // pred_fallthru
          _
        // Predicated region
        $region196: #{get_uncertainty_forward.4} parent=186 // pred_check
          %p1153 = pneg %p305
        $region197: #{get_uncertainty_forward.4} parent=186 // pred_check_branch
          %1155 = sbr.rel (%p1153) target = $region199
        $region198: #{get_uncertainty_forward.4} parent=186 // pred_region
          %p1156 = scmp.lt.s32.totalorder %s28, 1
          %s1157 = scalar_select %p1156, %s28, 1
          %p1158 = scmp.lt.s32.totalorder %s29, 1
          %s1159 = scalar_select %p1158, %s29, 1
          %s1160 = smul.addr %s1157, 2
          %s1161 = sadd.s32 %s1159, %s1160
          %s1162 = scalar_lea.vmem %s10, %s1161
        $region199: #{get_uncertainty_forward.4} parent=186 // pred_fallthru
          _
      $region187: #{get_uncertainty_forward.4} parent=5 // pred_fallthru
        _
    $region6: #{get_uncertainty_forward.4} parent=1 // loop_footer
      %s21 = sadd.s32 1, %s17
    $region7: #{get_uncertainty_forward.4} parent=1 // loop_footer_branch
      %16 = sbr.rel target = $region3
    $region8: #{get_uncertainty_forward.4} parent=1 // loop_exit
      _

</llo_original>
